<compile_context>
chip_gen: v7x
topology: tpu7x:2x2x1
jax: 0.10.0
libtpu: 0.0.40
codegen_flags: <defaults>
</compile_context>

<pallas_src>
from functools import partial

import jax
import jax.numpy as jnp
from jax.experimental import pallas as pl
from jax.experimental.pallas import tpu as pltpu

_SLAB_LANES = 128  # lane-dense packed output: [spk (H) | pred (O) | zero pad]


def _rsnn_kernel(x_ref, w_hid_ref, w_cat_ref, v_bias_ref,
                 alpha_h_ref, beta_h_ref, alpha_o_ref, beta_o_ref,
                 out_ref):
    T, B, D = x_ref.shape              # (time, batch tile, input features)
    H = v_bias_ref.shape[1]
    O = alpha_o_ref.shape[1]
    L = out_ref.shape[-1]              # 128-lane output slab
    thr = jnp.float32(1.0)

    # Hoist resident parameters / loop-invariant arithmetic once.
    w_hid = w_hid_ref[...]             # (D, H)   bf16
    w_cat = w_cat_ref[...]             # (H, H+O) bf16 = [V_rec | W_out]
    v_bias = v_bias_ref[...]           # (1, H)   f32
    alpha_h = alpha_h_ref[...]         # (1, H)
    beta_h = beta_h_ref[...]           # (1, H)
    alpha_o = alpha_o_ref[...]         # (1, O)
    beta_o = beta_o_ref[...]           # (1, O)
    omb_h = 1.0 - beta_h
    omb_o = 1.0 - beta_o

    # Input projection with the bias folded in.  drive[t] feeds step t+1
    # (one-step input delay: fc_hidden sees x[t]).  No recurrent dependence,
    # so these matmuls sit entirely off the serial per-step chain.
    drive = [
        jnp.dot(x_ref[t], w_hid, preferred_element_type=jnp.float32) + v_bias
        for t in range(T - 1)
    ]  # list of (B, H) f32

    pad = jnp.zeros((B, L - H - O), jnp.float32)

    # ---- t = 0: self.inp is None -> zero input; spk/syn/mem start at zero. ----
    syn = jnp.broadcast_to(v_bias, (B, H)).astype(jnp.float32)   # alpha*0 + 0 + (V@0 + b)
    mem = omb_h * syn                                            # no reset (spk_prev = 0)
    spk = jnp.where(mem > thr, 1.0, 0.0)
    syn_o = jnp.zeros((B, O), jnp.float32)                       # fc_out(0) = 0
    mem_o = jnp.zeros((B, O), jnp.float32)
    out_ref[0] = jnp.concatenate([spk, mem_o, pad], axis=-1)     # dense 128-lane store

    # ---- t = 1 .. T-1: fully unrolled serial recurrence. ----
    for t in range(1, T):
        # Fused recurrent + readout projection (shared LHS = previous spikes),
        # bf16 operands, f32 accumulation.
        y = jnp.dot(spk.astype(w_cat.dtype), w_cat,
                    preferred_element_type=jnp.float32)          # (B, H+O)

        # Hidden recurrent LIF (reset mechanism 'zero', threshold 1).
        syn = alpha_h * syn + drive[t - 1] + y[:, :H]
        mem = (beta_h * mem + omb_h * syn) * (1.0 - spk)         # reset mask = spk[t-1]
        spk = jnp.where(mem > thr, 1.0, 0.0)

        # Readout LIF (reset mechanism 'none').
        syn_o = alpha_o * syn_o + y[:, H:]
        mem_o = beta_o * mem_o + omb_o * syn_o

        out_ref[t] = jnp.concatenate([spk, mem_o, pad], axis=-1)


@partial(jax.jit, static_argnames=("b_tile",))
def tiny_rsnn_forward(x, w_hid, w_cat, v_bias,
                      alpha_h, beta_h, alpha_o, beta_o, *, b_tile=16):
    """Batched forward: x is (T, B, D); returns (pred (T,B,O), spk_rec (T,B,H))."""
    T, B, D = x.shape
    H = v_bias.shape[1]
    O = alpha_o.shape[1]
    assert B % b_tile == 0, "batch must be a multiple of the batch tile"
    assert H + O <= _SLAB_LANES
    num_tiles = B // b_tile

    x = x.astype(jnp.bfloat16)   # bf16 MXU operands; state math stays f32 in-kernel

    slab = pl.pallas_call(
        _rsnn_kernel,
        grid=(num_tiles,),
        in_specs=[
            pl.BlockSpec((T, b_tile, D), lambda i: (0, i, 0)),   # x tile streams
            pl.BlockSpec((D, H), lambda i: (0, 0)),              # weights stay resident
            pl.BlockSpec((H, H + O), lambda i: (0, 0)),
            pl.BlockSpec((1, H), lambda i: (0, 0)),
            pl.BlockSpec((1, H), lambda i: (0, 0)),
            pl.BlockSpec((1, H), lambda i: (0, 0)),
            pl.BlockSpec((1, O), lambda i: (0, 0)),
            pl.BlockSpec((1, O), lambda i: (0, 0)),
        ],
        out_specs=pl.BlockSpec((T, b_tile, _SLAB_LANES), lambda i: (0, i, 0)),
        out_shape=jax.ShapeDtypeStruct((T, B, _SLAB_LANES), jnp.float32),
        compiler_params=pltpu.CompilerParams(
            dimension_semantics=("parallel",)),                  # shards over v7x's 2 TCs
    )(x, w_hid, w_cat, v_bias, alpha_h, beta_h, alpha_o, beta_o)

    spk_rec = slab[:, :, :H]
    pred = slab[:, :, H:H + O]
    return pred, spk_rec


def tiny_rsnn_reference(x, w_hid, w_cat, v_bias, alpha_h, beta_h, alpha_o, beta_o):
    """Pure-JAX reference mirroring the kernel math (bf16 matmul operands, f32 state)."""
    T, B, D = x.shape
    H = v_bias.shape[1]
    O = alpha_o.shape[1]
    xb = x.astype(jnp.bfloat16)
    omb_h = 1.0 - beta_h
    omb_o = 1.0 - beta_o
    spk = jnp.zeros((B, H), jnp.float32)
    syn = jnp.zeros((B, H), jnp.float32)
    mem = jnp.zeros((B, H), jnp.float32)
    syn_o = jnp.zeros((B, O), jnp.float32)
    mem_o = jnp.zeros((B, O), jnp.float32)
    inp_prev = jnp.zeros((B, D), jnp.bfloat16)
    preds, spks = [], []
    for t in range(T):
        inp_hidden = jnp.dot(inp_prev, w_hid, preferred_element_type=jnp.float32) + v_bias
        y = jnp.dot(spk.astype(jnp.bfloat16), w_cat, preferred_element_type=jnp.float32)
        syn = alpha_h * syn + inp_hidden + y[:, :H]
        mem = (beta_h * mem + omb_h * syn) * (1.0 - spk)
        spk = jnp.where(mem > 1.0, 1.0, 0.0)
        syn_o = alpha_o * syn_o + y[:, H:]
        mem_o = beta_o * mem_o + omb_o * syn_o
        preds.append(mem_o)
        spks.append(spk)
        inp_prev = xb[t]
    return jnp.stack(preds), jnp.stack(spks)


def make_params(key, input_size, hidden_size, output_size, dt):
    """Deterministic synthetic parameters mirroring tinyRSNN.__init__ shapes.

    The recurrent/readout weight concat (w_cat) and the transposes / bf16 casts
    are done HERE, once, so the per-call forward does no weight preprocessing.
    """
    ks = jax.random.split(key, 8)

    # torch nn.Linear weights are (out_features, in_features); fc_* have no bias.
    w_hid_t = jax.random.normal(ks[0], (hidden_size, input_size), jnp.float32) / jnp.sqrt(input_size)
    w_out_t = jax.random.normal(ks[1], (output_size, hidden_size), jnp.float32) / jnp.sqrt(hidden_size)
    # all_to_all recurrent Linear(hidden, hidden) inside RSynaptic (bias=True by default).
    v_rec_t = jax.random.normal(ks[2], (hidden_size, hidden_size), jnp.float32) / jnp.sqrt(hidden_size)
    v_bias = 0.01 * jax.random.normal(ks[3], (hidden_size,), jnp.float32)

    mem_param_hidden = jax.random.normal(ks[4], (hidden_size,), jnp.float32)
    syn_param_hidden = jax.random.normal(ks[5], (hidden_size,), jnp.float32)
    mem_param_readout = jax.random.normal(ks[6], (output_size,), jnp.float32)
    syn_param_readout = jax.random.normal(ks[7], (output_size,), jnp.float32)

    tau_mem_hidden, tau_syn_hidden = 0.02, 0.01
    tau_mem_readout, tau_syn_readout = 0.05, 0.01

    alpha_h = jnp.exp(-dt / (jax.nn.softplus(syn_param_hidden) * tau_syn_hidden))
    beta_h = jnp.exp(-dt / (jax.nn.softplus(mem_param_hidden) * tau_mem_hidden))
    alpha_o = jnp.exp(-dt / (jax.nn.softplus(syn_param_readout) * tau_syn_readout))
    beta_o = jnp.exp(-dt / (jax.nn.softplus(mem_param_readout) * tau_mem_readout))

    w_hid = w_hid_t.T.astype(jnp.bfloat16)                              # (D, H)
    w_cat = jnp.concatenate([v_rec_t.T, w_out_t.T], axis=1).astype(jnp.bfloat16)  # (H, H+O)

    return dict(
        w_hid=w_hid,
        w_cat=w_cat,
        v_bias=v_bias[None, :],           # (1, H) f32
        alpha_h=alpha_h[None, :],         # (1, H)
        beta_h=beta_h[None, :],           # (1, H)
        alpha_o=alpha_o[None, :],         # (1, O)
        beta_o=beta_o[None, :],           # (1, O)
    )


if __name__ == "__main__":
    key = jax.random.PRNGKey(0)
    k_x, k_p = jax.random.split(key)

    # seq=8, input_size=16, hidden_size=32, output_size=2; small batch of sequences.
    T, D, H, O = 8, 16, 32, 2
    B, B_TILE = 32, 16           # 2 grid steps over the batch ("parallel" axis)
    dt = 0.004

    x = jax.random.normal(k_x, (T, B, D), jnp.float32)   # time-major batched input
    params = make_params(k_p, D, H, O, dt)

    pred, spk_rec = tiny_rsnn_forward(
        x, params["w_hid"], params["w_cat"], params["v_bias"],
        params["alpha_h"], params["beta_h"], params["alpha_o"], params["beta_o"],
        b_tile=B_TILE)

    pred = jax.block_until_ready(pred)
    spk_rec = jax.block_until_ready(spk_rec)

    assert pred.shape == (T, B, O)
    assert spk_rec.shape == (T, B, H)
    assert bool(jnp.all(jnp.isfinite(pred)))
    assert bool(jnp.all(jnp.isfinite(spk_rec)))

    # Pure-JAX reference check (same bf16-operand / f32-state math).
    pred_ref, spk_ref = tiny_rsnn_reference(
        x, params["w_hid"], params["w_cat"], params["v_bias"],
        params["alpha_h"], params["beta_h"], params["alpha_o"], params["beta_o"])
    pred_err = float(jnp.max(jnp.abs(pred - pred_ref)))
    spk_flip_rate = float(jnp.mean(jnp.abs(spk_rec - spk_ref)))
    assert pred_err < 5e-2, f"pred mismatch: max abs err {pred_err}"
    assert spk_flip_rate < 1e-2, f"spike mismatch rate {spk_flip_rate}"

    print("KERNEL_OK")
</pallas_src>

<mosaic_0001>
module attributes {stable_mosaic.version = 11 : i64} {
  func.func @_rsnn_kernel(%arg0: i32, %arg1: memref<8x16x16xbf16, #tpu.memory_space<vmem>>, %arg2: memref<16x32xbf16, #tpu.memory_space<vmem>>, %arg3: memref<32x34xbf16, #tpu.memory_space<vmem>>, %arg4: memref<1x32xf32, #tpu.memory_space<vmem>>, %arg5: memref<1x32xf32, #tpu.memory_space<vmem>>, %arg6: memref<1x32xf32, #tpu.memory_space<vmem>>, %arg7: memref<1x2xf32, #tpu.memory_space<vmem>>, %arg8: memref<1x2xf32, #tpu.memory_space<vmem>>, %arg9: memref<8x16x128xf32, #tpu.memory_space<vmem>>) attributes {dimension_semantics = [#tpu.dimension_semantics<parallel>], iteration_bounds = array<i64: 2>, scalar_prefetch = 0 : i64, scratch_operands = 0 : i64, tpu.core_type = #tpu.core_type<tc>, window_params = [{transform_indices = @transform_0, window_bounds = array<i64: 8, 16, 16>}, {pipeline_mode = #tpu.pipeline_mode<synchronous>, transform_indices = @transform_1, window_bounds = array<i64: 16, 32>}, {pipeline_mode = #tpu.pipeline_mode<synchronous>, transform_indices = @transform_2, window_bounds = array<i64: 32, 34>}, {pipeline_mode = #tpu.pipeline_mode<synchronous>, transform_indices = @transform_3, window_bounds = array<i64: 1, 32>}, {pipeline_mode = #tpu.pipeline_mode<synchronous>, transform_indices = @transform_4, window_bounds = array<i64: 1, 32>}, {pipeline_mode = #tpu.pipeline_mode<synchronous>, transform_indices = @transform_5, window_bounds = array<i64: 1, 32>}, {pipeline_mode = #tpu.pipeline_mode<synchronous>, transform_indices = @transform_6, window_bounds = array<i64: 1, 2>}, {pipeline_mode = #tpu.pipeline_mode<synchronous>, transform_indices = @transform_7, window_bounds = array<i64: 1, 2>}, {transform_indices = @transform_8, window_bounds = array<i64: 8, 16, 128>}]} {
    %c0 = arith.constant 0 : index
    %c0_0 = arith.constant 0 : index
    %0 = vector.load %arg2[%c0, %c0_0] : memref<16x32xbf16, #tpu.memory_space<vmem>>, vector<16x32xbf16>
    %c0_1 = arith.constant 0 : index
    %c0_2 = arith.constant 0 : index
    %1 = vector.load %arg3[%c0_1, %c0_2] : memref<32x34xbf16, #tpu.memory_space<vmem>>, vector<32x34xbf16>
    %c0_3 = arith.constant 0 : index
    %c0_4 = arith.constant 0 : index
    %2 = vector.load %arg4[%c0_3, %c0_4] : memref<1x32xf32, #tpu.memory_space<vmem>>, vector<1x32xf32>
    %c0_5 = arith.constant 0 : index
    %c0_6 = arith.constant 0 : index
    %3 = vector.load %arg5[%c0_5, %c0_6] : memref<1x32xf32, #tpu.memory_space<vmem>>, vector<1x32xf32>
    %c0_7 = arith.constant 0 : index
    %c0_8 = arith.constant 0 : index
    %4 = vector.load %arg6[%c0_7, %c0_8] : memref<1x32xf32, #tpu.memory_space<vmem>>, vector<1x32xf32>
    %c0_9 = arith.constant 0 : index
    %c0_10 = arith.constant 0 : index
    %5 = vector.load %arg7[%c0_9, %c0_10] : memref<1x2xf32, #tpu.memory_space<vmem>>, vector<1x2xf32>
    %c0_11 = arith.constant 0 : index
    %c0_12 = arith.constant 0 : index
    %6 = vector.load %arg8[%c0_11, %c0_12] : memref<1x2xf32, #tpu.memory_space<vmem>>, vector<1x2xf32>
    %cst = arith.constant 1.000000e+00 : f32
    %7 = vector.broadcast %cst : f32 to vector<1x32xf32>
    %8 = arith.subf %7, %4 : vector<1x32xf32>
    %cst_13 = arith.constant 1.000000e+00 : f32
    %9 = vector.broadcast %cst_13 : f32 to vector<1x2xf32>
    %10 = arith.subf %9, %6 : vector<1x2xf32>
    %c0_14 = arith.constant 0 : index
    %c0_15 = arith.constant 0 : index
    %c0_16 = arith.constant 0 : index
    %11 = vector.load %arg1[%c0_14, %c0_15, %c0_16] : memref<8x16x16xbf16, #tpu.memory_space<vmem>>, vector<1x16x16xbf16>
    %12 = vector.shape_cast %11 : vector<1x16x16xbf16> to vector<16x16xbf16>
    %cst_17 = arith.constant dense<0.000000e+00> : vector<16x32xf32>
    %13 = tpu.matmul %12, %0, %cst_17 {dimension_numbers = #tpu.dot_dimension_numbers<[1], [0], [0], [1], [0, 0, 1, 1], [], []>} : vector<16x16xbf16>, vector<16x32xbf16>, vector<16x32xf32> -> vector<16x32xf32>
    %14 = vector.broadcast %2 : vector<1x32xf32> to vector<16x32xf32>
    %15 = arith.addf %13, %14 : vector<16x32xf32>
    %c1 = arith.constant 1 : index
    %c0_18 = arith.constant 0 : index
    %c0_19 = arith.constant 0 : index
    %16 = vector.load %arg1[%c1, %c0_18, %c0_19] : memref<8x16x16xbf16, #tpu.memory_space<vmem>>, vector<1x16x16xbf16>
    %17 = vector.shape_cast %16 : vector<1x16x16xbf16> to vector<16x16xbf16>
    %cst_20 = arith.constant dense<0.000000e+00> : vector<16x32xf32>
    %18 = tpu.matmul %17, %0, %cst_20 {dimension_numbers = #tpu.dot_dimension_numbers<[1], [0], [0], [1], [0, 0, 1, 1], [], []>} : vector<16x16xbf16>, vector<16x32xbf16>, vector<16x32xf32> -> vector<16x32xf32>
    %19 = vector.broadcast %2 : vector<1x32xf32> to vector<16x32xf32>
    %20 = arith.addf %18, %19 : vector<16x32xf32>
    %c2 = arith.constant 2 : index
    %c0_21 = arith.constant 0 : index
    %c0_22 = arith.constant 0 : index
    %21 = vector.load %arg1[%c2, %c0_21, %c0_22] : memref<8x16x16xbf16, #tpu.memory_space<vmem>>, vector<1x16x16xbf16>
    %22 = vector.shape_cast %21 : vector<1x16x16xbf16> to vector<16x16xbf16>
    %cst_23 = arith.constant dense<0.000000e+00> : vector<16x32xf32>
    %23 = tpu.matmul %22, %0, %cst_23 {dimension_numbers = #tpu.dot_dimension_numbers<[1], [0], [0], [1], [0, 0, 1, 1], [], []>} : vector<16x16xbf16>, vector<16x32xbf16>, vector<16x32xf32> -> vector<16x32xf32>
    %24 = vector.broadcast %2 : vector<1x32xf32> to vector<16x32xf32>
    %25 = arith.addf %23, %24 : vector<16x32xf32>
    %c3 = arith.constant 3 : index
    %c0_24 = arith.constant 0 : index
    %c0_25 = arith.constant 0 : index
    %26 = vector.load %arg1[%c3, %c0_24, %c0_25] : memref<8x16x16xbf16, #tpu.memory_space<vmem>>, vector<1x16x16xbf16>
    %27 = vector.shape_cast %26 : vector<1x16x16xbf16> to vector<16x16xbf16>
    %cst_26 = arith.constant dense<0.000000e+00> : vector<16x32xf32>
    %28 = tpu.matmul %27, %0, %cst_26 {dimension_numbers = #tpu.dot_dimension_numbers<[1], [0], [0], [1], [0, 0, 1, 1], [], []>} : vector<16x16xbf16>, vector<16x32xbf16>, vector<16x32xf32> -> vector<16x32xf32>
    %29 = vector.broadcast %2 : vector<1x32xf32> to vector<16x32xf32>
    %30 = arith.addf %28, %29 : vector<16x32xf32>
    %c4 = arith.constant 4 : index
    %c0_27 = arith.constant 0 : index
    %c0_28 = arith.constant 0 : index
    %31 = vector.load %arg1[%c4, %c0_27, %c0_28] : memref<8x16x16xbf16, #tpu.memory_space<vmem>>, vector<1x16x16xbf16>
    %32 = vector.shape_cast %31 : vector<1x16x16xbf16> to vector<16x16xbf16>
    %cst_29 = arith.constant dense<0.000000e+00> : vector<16x32xf32>
    %33 = tpu.matmul %32, %0, %cst_29 {dimension_numbers = #tpu.dot_dimension_numbers<[1], [0], [0], [1], [0, 0, 1, 1], [], []>} : vector<16x16xbf16>, vector<16x32xbf16>, vector<16x32xf32> -> vector<16x32xf32>
    %34 = vector.broadcast %2 : vector<1x32xf32> to vector<16x32xf32>
    %35 = arith.addf %33, %34 : vector<16x32xf32>
    %c5 = arith.constant 5 : index
    %c0_30 = arith.constant 0 : index
    %c0_31 = arith.constant 0 : index
    %36 = vector.load %arg1[%c5, %c0_30, %c0_31] : memref<8x16x16xbf16, #tpu.memory_space<vmem>>, vector<1x16x16xbf16>
    %37 = vector.shape_cast %36 : vector<1x16x16xbf16> to vector<16x16xbf16>
    %cst_32 = arith.constant dense<0.000000e+00> : vector<16x32xf32>
    %38 = tpu.matmul %37, %0, %cst_32 {dimension_numbers = #tpu.dot_dimension_numbers<[1], [0], [0], [1], [0, 0, 1, 1], [], []>} : vector<16x16xbf16>, vector<16x32xbf16>, vector<16x32xf32> -> vector<16x32xf32>
    %39 = vector.broadcast %2 : vector<1x32xf32> to vector<16x32xf32>
    %40 = arith.addf %38, %39 : vector<16x32xf32>
    %c6 = arith.constant 6 : index
    %c0_33 = arith.constant 0 : index
    %c0_34 = arith.constant 0 : index
    %41 = vector.load %arg1[%c6, %c0_33, %c0_34] : memref<8x16x16xbf16, #tpu.memory_space<vmem>>, vector<1x16x16xbf16>
    %42 = vector.shape_cast %41 : vector<1x16x16xbf16> to vector<16x16xbf16>
    %cst_35 = arith.constant dense<0.000000e+00> : vector<16x32xf32>
    %43 = tpu.matmul %42, %0, %cst_35 {dimension_numbers = #tpu.dot_dimension_numbers<[1], [0], [0], [1], [0, 0, 1, 1], [], []>} : vector<16x16xbf16>, vector<16x32xbf16>, vector<16x32xf32> -> vector<16x32xf32>
    %44 = vector.broadcast %2 : vector<1x32xf32> to vector<16x32xf32>
    %45 = arith.addf %43, %44 : vector<16x32xf32>
    %cst_36 = arith.constant 0.000000e+00 : f32
    %46 = vector.broadcast %cst_36 : f32 to vector<16x94xf32>
    %47 = vector.shape_cast %2 : vector<1x32xf32> to vector<1x32xf32>
    %48 = vector.broadcast %47 : vector<1x32xf32> to vector<16x32xf32>
    %49 = vector.broadcast %8 : vector<1x32xf32> to vector<16x32xf32>
    %50 = arith.mulf %49, %48 : vector<16x32xf32>
    %cst_37 = arith.constant 1.000000e+00 : f32
    %51 = vector.broadcast %cst_37 : f32 to vector<16x32xf32>
    %52 = arith.cmpf ogt, %50, %51 : vector<16x32xf32>
    %cst_38 = arith.constant 1.000000e+00 : f32
    %cst_39 = arith.constant 0.000000e+00 : f32
    %53 = vector.broadcast %cst_38 : f32 to vector<16x32xf32>
    %54 = vector.broadcast %cst_39 : f32 to vector<16x32xf32>
    %55 = arith.select %52, %53, %54 : vector<16x32xi1>, vector<16x32xf32>
    %cst_40 = arith.constant 0.000000e+00 : f32
    %56 = vector.broadcast %cst_40 : f32 to vector<16x2xf32>
    %cst_41 = arith.constant 0.000000e+00 : f32
    %57 = vector.broadcast %cst_41 : f32 to vector<16x2xf32>
    %58 = tpu.concatenate %55, %57, %46 in 1 : vector<16x32xf32>, vector<16x2xf32>, vector<16x94xf32> -> vector<16x128xf32>
    %c0_42 = arith.constant 0 : index
    %c0_43 = arith.constant 0 : index
    %c0_44 = arith.constant 0 : index
    %59 = vector.load %arg9[%c0_42, %c0_43, %c0_44] : memref<8x16x128xf32, #tpu.memory_space<vmem>>, vector<1x16x128xf32>
    %60 = vector.shape_cast %59 : vector<1x16x128xf32> to vector<16x128xf32>
    %61 = vector.shape_cast %58 : vector<16x128xf32> to vector<1x16x128xf32>
    tpu.vector_store %arg9[%c0_42, %c0_43, %c0_44], %61 {strides = array<i32>} : memref<8x16x128xf32, #tpu.memory_space<vmem>>, vector<1x16x128xf32>,
    %62 = arith.truncf %55 : vector<16x32xf32> to vector<16x32xbf16>
    %cst_45 = arith.constant dense<0.000000e+00> : vector<16x34xf32>
    %63 = tpu.matmul %62, %1, %cst_45 {dimension_numbers = #tpu.dot_dimension_numbers<[1], [0], [0], [1], [0, 0, 1, 1], [], []>} : vector<16x32xbf16>, vector<32x34xbf16>, vector<16x34xf32> -> vector<16x34xf32>
    %64 = vector.broadcast %3 : vector<1x32xf32> to vector<16x32xf32>
    %65 = arith.mulf %64, %48 : vector<16x32xf32>
    %66 = arith.addf %65, %15 : vector<16x32xf32>
    %67 = vector.extract_strided_slice %63 {offsets = [0, 0], sizes = [16, 32], strides = [1, 1]} : vector<16x34xf32> to vector<16x32xf32>
    %68 = arith.addf %66, %67 : vector<16x32xf32>
    %69 = vector.broadcast %4 : vector<1x32xf32> to vector<16x32xf32>
    %70 = arith.mulf %69, %50 : vector<16x32xf32>
    %71 = vector.broadcast %8 : vector<1x32xf32> to vector<16x32xf32>
    %72 = arith.mulf %71, %68 : vector<16x32xf32>
    %73 = arith.addf %70, %72 : vector<16x32xf32>
    %cst_46 = arith.constant 1.000000e+00 : f32
    %74 = vector.broadcast %cst_46 : f32 to vector<16x32xf32>
    %75 = arith.subf %74, %55 : vector<16x32xf32>
    %76 = arith.mulf %73, %75 : vector<16x32xf32>
    %cst_47 = arith.constant 1.000000e+00 : f32
    %77 = vector.broadcast %cst_47 : f32 to vector<16x32xf32>
    %78 = arith.cmpf ogt, %76, %77 : vector<16x32xf32>
    %cst_48 = arith.constant 1.000000e+00 : f32
    %cst_49 = arith.constant 0.000000e+00 : f32
    %79 = vector.broadcast %cst_48 : f32 to vector<16x32xf32>
    %80 = vector.broadcast %cst_49 : f32 to vector<16x32xf32>
    %81 = arith.select %78, %79, %80 : vector<16x32xi1>, vector<16x32xf32>
    %82 = vector.broadcast %5 : vector<1x2xf32> to vector<16x2xf32>
    %83 = arith.mulf %82, %56 : vector<16x2xf32>
    %84 = vector.extract_strided_slice %63 {offsets = [0, 32], sizes = [16, 2], strides = [1, 1]} : vector<16x34xf32> to vector<16x2xf32>
    %85 = arith.addf %83, %84 : vector<16x2xf32>
    %86 = vector.broadcast %6 : vector<1x2xf32> to vector<16x2xf32>
    %87 = arith.mulf %86, %57 : vector<16x2xf32>
    %88 = vector.broadcast %10 : vector<1x2xf32> to vector<16x2xf32>
    %89 = arith.mulf %88, %85 : vector<16x2xf32>
    %90 = arith.addf %87, %89 : vector<16x2xf32>
    %91 = tpu.concatenate %81, %90, %46 in 1 : vector<16x32xf32>, vector<16x2xf32>, vector<16x94xf32> -> vector<16x128xf32>
    %c1_50 = arith.constant 1 : index
    %c0_51 = arith.constant 0 : index
    %c0_52 = arith.constant 0 : index
    %92 = vector.load %arg9[%c1_50, %c0_51, %c0_52] : memref<8x16x128xf32, #tpu.memory_space<vmem>>, vector<1x16x128xf32>
    %93 = vector.shape_cast %92 : vector<1x16x128xf32> to vector<16x128xf32>
    %94 = vector.shape_cast %91 : vector<16x128xf32> to vector<1x16x128xf32>
    tpu.vector_store %arg9[%c1_50, %c0_51, %c0_52], %94 {strides = array<i32>} : memref<8x16x128xf32, #tpu.memory_space<vmem>>, vector<1x16x128xf32>,
    %95 = arith.truncf %81 : vector<16x32xf32> to vector<16x32xbf16>
    %cst_53 = arith.constant dense<0.000000e+00> : vector<16x34xf32>
    %96 = tpu.matmul %95, %1, %cst_53 {dimension_numbers = #tpu.dot_dimension_numbers<[1], [0], [0], [1], [0, 0, 1, 1], [], []>} : vector<16x32xbf16>, vector<32x34xbf16>, vector<16x34xf32> -> vector<16x34xf32>
    %97 = vector.broadcast %3 : vector<1x32xf32> to vector<16x32xf32>
    %98 = arith.mulf %97, %68 : vector<16x32xf32>
    %99 = arith.addf %98, %20 : vector<16x32xf32>
    %100 = vector.extract_strided_slice %96 {offsets = [0, 0], sizes = [16, 32], strides = [1, 1]} : vector<16x34xf32> to vector<16x32xf32>
    %101 = arith.addf %99, %100 : vector<16x32xf32>
    %102 = vector.broadcast %4 : vector<1x32xf32> to vector<16x32xf32>
    %103 = arith.mulf %102, %76 : vector<16x32xf32>
    %104 = vector.broadcast %8 : vector<1x32xf32> to vector<16x32xf32>
    %105 = arith.mulf %104, %101 : vector<16x32xf32>
    %106 = arith.addf %103, %105 : vector<16x32xf32>
    %cst_54 = arith.constant 1.000000e+00 : f32
    %107 = vector.broadcast %cst_54 : f32 to vector<16x32xf32>
    %108 = arith.subf %107, %81 : vector<16x32xf32>
    %109 = arith.mulf %106, %108 : vector<16x32xf32>
    %cst_55 = arith.constant 1.000000e+00 : f32
    %110 = vector.broadcast %cst_55 : f32 to vector<16x32xf32>
    %111 = arith.cmpf ogt, %109, %110 : vector<16x32xf32>
    %cst_56 = arith.constant 1.000000e+00 : f32
    %cst_57 = arith.constant 0.000000e+00 : f32
    %112 = vector.broadcast %cst_56 : f32 to vector<16x32xf32>
    %113 = vector.broadcast %cst_57 : f32 to vector<16x32xf32>
    %114 = arith.select %111, %112, %113 : vector<16x32xi1>, vector<16x32xf32>
    %115 = vector.broadcast %5 : vector<1x2xf32> to vector<16x2xf32>
    %116 = arith.mulf %115, %85 : vector<16x2xf32>
    %117 = vector.extract_strided_slice %96 {offsets = [0, 32], sizes = [16, 2], strides = [1, 1]} : vector<16x34xf32> to vector<16x2xf32>
    %118 = arith.addf %116, %117 : vector<16x2xf32>
    %119 = vector.broadcast %6 : vector<1x2xf32> to vector<16x2xf32>
    %120 = arith.mulf %119, %90 : vector<16x2xf32>
    %121 = vector.broadcast %10 : vector<1x2xf32> to vector<16x2xf32>
    %122 = arith.mulf %121, %118 : vector<16x2xf32>
    %123 = arith.addf %120, %122 : vector<16x2xf32>
    %124 = tpu.concatenate %114, %123, %46 in 1 : vector<16x32xf32>, vector<16x2xf32>, vector<16x94xf32> -> vector<16x128xf32>
    %c2_58 = arith.constant 2 : index
    %c0_59 = arith.constant 0 : index
    %c0_60 = arith.constant 0 : index
    %125 = vector.load %arg9[%c2_58, %c0_59, %c0_60] : memref<8x16x128xf32, #tpu.memory_space<vmem>>, vector<1x16x128xf32>
    %126 = vector.shape_cast %125 : vector<1x16x128xf32> to vector<16x128xf32>
    %127 = vector.shape_cast %124 : vector<16x128xf32> to vector<1x16x128xf32>
    tpu.vector_store %arg9[%c2_58, %c0_59, %c0_60], %127 {strides = array<i32>} : memref<8x16x128xf32, #tpu.memory_space<vmem>>, vector<1x16x128xf32>,
    %128 = arith.truncf %114 : vector<16x32xf32> to vector<16x32xbf16>
    %cst_61 = arith.constant dense<0.000000e+00> : vector<16x34xf32>
    %129 = tpu.matmul %128, %1, %cst_61 {dimension_numbers = #tpu.dot_dimension_numbers<[1], [0], [0], [1], [0, 0, 1, 1], [], []>} : vector<16x32xbf16>, vector<32x34xbf16>, vector<16x34xf32> -> vector<16x34xf32>
    %130 = vector.broadcast %3 : vector<1x32xf32> to vector<16x32xf32>
    %131 = arith.mulf %130, %101 : vector<16x32xf32>
    %132 = arith.addf %131, %25 : vector<16x32xf32>
    %133 = vector.extract_strided_slice %129 {offsets = [0, 0], sizes = [16, 32], strides = [1, 1]} : vector<16x34xf32> to vector<16x32xf32>
    %134 = arith.addf %132, %133 : vector<16x32xf32>
    %135 = vector.broadcast %4 : vector<1x32xf32> to vector<16x32xf32>
    %136 = arith.mulf %135, %109 : vector<16x32xf32>
    %137 = vector.broadcast %8 : vector<1x32xf32> to vector<16x32xf32>
    %138 = arith.mulf %137, %134 : vector<16x32xf32>
    %139 = arith.addf %136, %138 : vector<16x32xf32>
    %cst_62 = arith.constant 1.000000e+00 : f32
    %140 = vector.broadcast %cst_62 : f32 to vector<16x32xf32>
    %141 = arith.subf %140, %114 : vector<16x32xf32>
    %142 = arith.mulf %139, %141 : vector<16x32xf32>
    %cst_63 = arith.constant 1.000000e+00 : f32
    %143 = vector.broadcast %cst_63 : f32 to vector<16x32xf32>
    %144 = arith.cmpf ogt, %142, %143 : vector<16x32xf32>
    %cst_64 = arith.constant 1.000000e+00 : f32
    %cst_65 = arith.constant 0.000000e+00 : f32
    %145 = vector.broadcast %cst_64 : f32 to vector<16x32xf32>
    %146 = vector.broadcast %cst_65 : f32 to vector<16x32xf32>
    %147 = arith.select %144, %145, %146 : vector<16x32xi1>, vector<16x32xf32>
    %148 = vector.broadcast %5 : vector<1x2xf32> to vector<16x2xf32>
    %149 = arith.mulf %148, %118 : vector<16x2xf32>
    %150 = vector.extract_strided_slice %129 {offsets = [0, 32], sizes = [16, 2], strides = [1, 1]} : vector<16x34xf32> to vector<16x2xf32>
    %151 = arith.addf %149, %150 : vector<16x2xf32>
    %152 = vector.broadcast %6 : vector<1x2xf32> to vector<16x2xf32>
    %153 = arith.mulf %152, %123 : vector<16x2xf32>
    %154 = vector.broadcast %10 : vector<1x2xf32> to vector<16x2xf32>
    %155 = arith.mulf %154, %151 : vector<16x2xf32>
    %156 = arith.addf %153, %155 : vector<16x2xf32>
    %157 = tpu.concatenate %147, %156, %46 in 1 : vector<16x32xf32>, vector<16x2xf32>, vector<16x94xf32> -> vector<16x128xf32>
    %c3_66 = arith.constant 3 : index
    %c0_67 = arith.constant 0 : index
    %c0_68 = arith.constant 0 : index
    %158 = vector.load %arg9[%c3_66, %c0_67, %c0_68] : memref<8x16x128xf32, #tpu.memory_space<vmem>>, vector<1x16x128xf32>
    %159 = vector.shape_cast %158 : vector<1x16x128xf32> to vector<16x128xf32>
    %160 = vector.shape_cast %157 : vector<16x128xf32> to vector<1x16x128xf32>
    tpu.vector_store %arg9[%c3_66, %c0_67, %c0_68], %160 {strides = array<i32>} : memref<8x16x128xf32, #tpu.memory_space<vmem>>, vector<1x16x128xf32>,
    %161 = arith.truncf %147 : vector<16x32xf32> to vector<16x32xbf16>
    %cst_69 = arith.constant dense<0.000000e+00> : vector<16x34xf32>
    %162 = tpu.matmul %161, %1, %cst_69 {dimension_numbers = #tpu.dot_dimension_numbers<[1], [0], [0], [1], [0, 0, 1, 1], [], []>} : vector<16x32xbf16>, vector<32x34xbf16>, vector<16x34xf32> -> vector<16x34xf32>
    %163 = vector.broadcast %3 : vector<1x32xf32> to vector<16x32xf32>
    %164 = arith.mulf %163, %134 : vector<16x32xf32>
    %165 = arith.addf %164, %30 : vector<16x32xf32>
    %166 = vector.extract_strided_slice %162 {offsets = [0, 0], sizes = [16, 32], strides = [1, 1]} : vector<16x34xf32> to vector<16x32xf32>
    %167 = arith.addf %165, %166 : vector<16x32xf32>
    %168 = vector.broadcast %4 : vector<1x32xf32> to vector<16x32xf32>
    %169 = arith.mulf %168, %142 : vector<16x32xf32>
    %170 = vector.broadcast %8 : vector<1x32xf32> to vector<16x32xf32>
    %171 = arith.mulf %170, %167 : vector<16x32xf32>
    %172 = arith.addf %169, %171 : vector<16x32xf32>
    %cst_70 = arith.constant 1.000000e+00 : f32
    %173 = vector.broadcast %cst_70 : f32 to vector<16x32xf32>
    %174 = arith.subf %173, %147 : vector<16x32xf32>
    %175 = arith.mulf %172, %174 : vector<16x32xf32>
    %cst_71 = arith.constant 1.000000e+00 : f32
    %176 = vector.broadcast %cst_71 : f32 to vector<16x32xf32>
    %177 = arith.cmpf ogt, %175, %176 : vector<16x32xf32>
    %cst_72 = arith.constant 1.000000e+00 : f32
    %cst_73 = arith.constant 0.000000e+00 : f32
    %178 = vector.broadcast %cst_72 : f32 to vector<16x32xf32>
    %179 = vector.broadcast %cst_73 : f32 to vector<16x32xf32>
    %180 = arith.select %177, %178, %179 : vector<16x32xi1>, vector<16x32xf32>
    %181 = vector.broadcast %5 : vector<1x2xf32> to vector<16x2xf32>
    %182 = arith.mulf %181, %151 : vector<16x2xf32>
    %183 = vector.extract_strided_slice %162 {offsets = [0, 32], sizes = [16, 2], strides = [1, 1]} : vector<16x34xf32> to vector<16x2xf32>
    %184 = arith.addf %182, %183 : vector<16x2xf32>
    %185 = vector.broadcast %6 : vector<1x2xf32> to vector<16x2xf32>
    %186 = arith.mulf %185, %156 : vector<16x2xf32>
    %187 = vector.broadcast %10 : vector<1x2xf32> to vector<16x2xf32>
    %188 = arith.mulf %187, %184 : vector<16x2xf32>
    %189 = arith.addf %186, %188 : vector<16x2xf32>
    %190 = tpu.concatenate %180, %189, %46 in 1 : vector<16x32xf32>, vector<16x2xf32>, vector<16x94xf32> -> vector<16x128xf32>
    %c4_74 = arith.constant 4 : index
    %c0_75 = arith.constant 0 : index
    %c0_76 = arith.constant 0 : index
    %191 = vector.load %arg9[%c4_74, %c0_75, %c0_76] : memref<8x16x128xf32, #tpu.memory_space<vmem>>, vector<1x16x128xf32>
    %192 = vector.shape_cast %191 : vector<1x16x128xf32> to vector<16x128xf32>
    %193 = vector.shape_cast %190 : vector<16x128xf32> to vector<1x16x128xf32>
    tpu.vector_store %arg9[%c4_74, %c0_75, %c0_76], %193 {strides = array<i32>} : memref<8x16x128xf32, #tpu.memory_space<vmem>>, vector<1x16x128xf32>,
    %194 = arith.truncf %180 : vector<16x32xf32> to vector<16x32xbf16>
    %cst_77 = arith.constant dense<0.000000e+00> : vector<16x34xf32>
    %195 = tpu.matmul %194, %1, %cst_77 {dimension_numbers = #tpu.dot_dimension_numbers<[1], [0], [0], [1], [0, 0, 1, 1], [], []>} : vector<16x32xbf16>, vector<32x34xbf16>, vector<16x34xf32> -> vector<16x34xf32>
    %196 = vector.broadcast %3 : vector<1x32xf32> to vector<16x32xf32>
    %197 = arith.mulf %196, %167 : vector<16x32xf32>
    %198 = arith.addf %197, %35 : vector<16x32xf32>
    %199 = vector.extract_strided_slice %195 {offsets = [0, 0], sizes = [16, 32], strides = [1, 1]} : vector<16x34xf32> to vector<16x32xf32>
    %200 = arith.addf %198, %199 : vector<16x32xf32>
    %201 = vector.broadcast %4 : vector<1x32xf32> to vector<16x32xf32>
    %202 = arith.mulf %201, %175 : vector<16x32xf32>
    %203 = vector.broadcast %8 : vector<1x32xf32> to vector<16x32xf32>
    %204 = arith.mulf %203, %200 : vector<16x32xf32>
    %205 = arith.addf %202, %204 : vector<16x32xf32>
    %cst_78 = arith.constant 1.000000e+00 : f32
    %206 = vector.broadcast %cst_78 : f32 to vector<16x32xf32>
    %207 = arith.subf %206, %180 : vector<16x32xf32>
    %208 = arith.mulf %205, %207 : vector<16x32xf32>
    %cst_79 = arith.constant 1.000000e+00 : f32
    %209 = vector.broadcast %cst_79 : f32 to vector<16x32xf32>
    %210 = arith.cmpf ogt, %208, %209 : vector<16x32xf32>
    %cst_80 = arith.constant 1.000000e+00 : f32
    %cst_81 = arith.constant 0.000000e+00 : f32
    %211 = vector.broadcast %cst_80 : f32 to vector<16x32xf32>
    %212 = vector.broadcast %cst_81 : f32 to vector<16x32xf32>
    %213 = arith.select %210, %211, %212 : vector<16x32xi1>, vector<16x32xf32>
    %214 = vector.broadcast %5 : vector<1x2xf32> to vector<16x2xf32>
    %215 = arith.mulf %214, %184 : vector<16x2xf32>
    %216 = vector.extract_strided_slice %195 {offsets = [0, 32], sizes = [16, 2], strides = [1, 1]} : vector<16x34xf32> to vector<16x2xf32>
    %217 = arith.addf %215, %216 : vector<16x2xf32>
    %218 = vector.broadcast %6 : vector<1x2xf32> to vector<16x2xf32>
    %219 = arith.mulf %218, %189 : vector<16x2xf32>
    %220 = vector.broadcast %10 : vector<1x2xf32> to vector<16x2xf32>
    %221 = arith.mulf %220, %217 : vector<16x2xf32>
    %222 = arith.addf %219, %221 : vector<16x2xf32>
    %223 = tpu.concatenate %213, %222, %46 in 1 : vector<16x32xf32>, vector<16x2xf32>, vector<16x94xf32> -> vector<16x128xf32>
    %c5_82 = arith.constant 5 : index
    %c0_83 = arith.constant 0 : index
    %c0_84 = arith.constant 0 : index
    %224 = vector.load %arg9[%c5_82, %c0_83, %c0_84] : memref<8x16x128xf32, #tpu.memory_space<vmem>>, vector<1x16x128xf32>
    %225 = vector.shape_cast %224 : vector<1x16x128xf32> to vector<16x128xf32>
    %226 = vector.shape_cast %223 : vector<16x128xf32> to vector<1x16x128xf32>
    tpu.vector_store %arg9[%c5_82, %c0_83, %c0_84], %226 {strides = array<i32>} : memref<8x16x128xf32, #tpu.memory_space<vmem>>, vector<1x16x128xf32>,
    %227 = arith.truncf %213 : vector<16x32xf32> to vector<16x32xbf16>
    %cst_85 = arith.constant dense<0.000000e+00> : vector<16x34xf32>
    %228 = tpu.matmul %227, %1, %cst_85 {dimension_numbers = #tpu.dot_dimension_numbers<[1], [0], [0], [1], [0, 0, 1, 1], [], []>} : vector<16x32xbf16>, vector<32x34xbf16>, vector<16x34xf32> -> vector<16x34xf32>
    %229 = vector.broadcast %3 : vector<1x32xf32> to vector<16x32xf32>
    %230 = arith.mulf %229, %200 : vector<16x32xf32>
    %231 = arith.addf %230, %40 : vector<16x32xf32>
    %232 = vector.extract_strided_slice %228 {offsets = [0, 0], sizes = [16, 32], strides = [1, 1]} : vector<16x34xf32> to vector<16x32xf32>
    %233 = arith.addf %231, %232 : vector<16x32xf32>
    %234 = vector.broadcast %4 : vector<1x32xf32> to vector<16x32xf32>
    %235 = arith.mulf %234, %208 : vector<16x32xf32>
    %236 = vector.broadcast %8 : vector<1x32xf32> to vector<16x32xf32>
    %237 = arith.mulf %236, %233 : vector<16x32xf32>
    %238 = arith.addf %235, %237 : vector<16x32xf32>
    %cst_86 = arith.constant 1.000000e+00 : f32
    %239 = vector.broadcast %cst_86 : f32 to vector<16x32xf32>
    %240 = arith.subf %239, %213 : vector<16x32xf32>
    %241 = arith.mulf %238, %240 : vector<16x32xf32>
    %cst_87 = arith.constant 1.000000e+00 : f32
    %242 = vector.broadcast %cst_87 : f32 to vector<16x32xf32>
    %243 = arith.cmpf ogt, %241, %242 : vector<16x32xf32>
    %cst_88 = arith.constant 1.000000e+00 : f32
    %cst_89 = arith.constant 0.000000e+00 : f32
    %244 = vector.broadcast %cst_88 : f32 to vector<16x32xf32>
    %245 = vector.broadcast %cst_89 : f32 to vector<16x32xf32>
    %246 = arith.select %243, %244, %245 : vector<16x32xi1>, vector<16x32xf32>
    %247 = vector.broadcast %5 : vector<1x2xf32> to vector<16x2xf32>
    %248 = arith.mulf %247, %217 : vector<16x2xf32>
    %249 = vector.extract_strided_slice %228 {offsets = [0, 32], sizes = [16, 2], strides = [1, 1]} : vector<16x34xf32> to vector<16x2xf32>
    %250 = arith.addf %248, %249 : vector<16x2xf32>
    %251 = vector.broadcast %6 : vector<1x2xf32> to vector<16x2xf32>
    %252 = arith.mulf %251, %222 : vector<16x2xf32>
    %253 = vector.broadcast %10 : vector<1x2xf32> to vector<16x2xf32>
    %254 = arith.mulf %253, %250 : vector<16x2xf32>
    %255 = arith.addf %252, %254 : vector<16x2xf32>
    %256 = tpu.concatenate %246, %255, %46 in 1 : vector<16x32xf32>, vector<16x2xf32>, vector<16x94xf32> -> vector<16x128xf32>
    %c6_90 = arith.constant 6 : index
    %c0_91 = arith.constant 0 : index
    %c0_92 = arith.constant 0 : index
    %257 = vector.load %arg9[%c6_90, %c0_91, %c0_92] : memref<8x16x128xf32, #tpu.memory_space<vmem>>, vector<1x16x128xf32>
    %258 = vector.shape_cast %257 : vector<1x16x128xf32> to vector<16x128xf32>
    %259 = vector.shape_cast %256 : vector<16x128xf32> to vector<1x16x128xf32>
    tpu.vector_store %arg9[%c6_90, %c0_91, %c0_92], %259 {strides = array<i32>} : memref<8x16x128xf32, #tpu.memory_space<vmem>>, vector<1x16x128xf32>,
    %260 = arith.truncf %246 : vector<16x32xf32> to vector<16x32xbf16>
    %cst_93 = arith.constant dense<0.000000e+00> : vector<16x34xf32>
    %261 = tpu.matmul %260, %1, %cst_93 {dimension_numbers = #tpu.dot_dimension_numbers<[1], [0], [0], [1], [0, 0, 1, 1], [], []>} : vector<16x32xbf16>, vector<32x34xbf16>, vector<16x34xf32> -> vector<16x34xf32>
    %262 = vector.broadcast %3 : vector<1x32xf32> to vector<16x32xf32>
    %263 = arith.mulf %262, %233 : vector<16x32xf32>
    %264 = arith.addf %263, %45 : vector<16x32xf32>
    %265 = vector.extract_strided_slice %261 {offsets = [0, 0], sizes = [16, 32], strides = [1, 1]} : vector<16x34xf32> to vector<16x32xf32>
    %266 = arith.addf %264, %265 : vector<16x32xf32>
    %267 = vector.broadcast %4 : vector<1x32xf32> to vector<16x32xf32>
    %268 = arith.mulf %267, %241 : vector<16x32xf32>
    %269 = vector.broadcast %8 : vector<1x32xf32> to vector<16x32xf32>
    %270 = arith.mulf %269, %266 : vector<16x32xf32>
    %271 = arith.addf %268, %270 : vector<16x32xf32>
    %cst_94 = arith.constant 1.000000e+00 : f32
    %272 = vector.broadcast %cst_94 : f32 to vector<16x32xf32>
    %273 = arith.subf %272, %246 : vector<16x32xf32>
    %274 = arith.mulf %271, %273 : vector<16x32xf32>
    %cst_95 = arith.constant 1.000000e+00 : f32
    %275 = vector.broadcast %cst_95 : f32 to vector<16x32xf32>
    %276 = arith.cmpf ogt, %274, %275 : vector<16x32xf32>
    %cst_96 = arith.constant 1.000000e+00 : f32
    %cst_97 = arith.constant 0.000000e+00 : f32
    %277 = vector.broadcast %cst_96 : f32 to vector<16x32xf32>
    %278 = vector.broadcast %cst_97 : f32 to vector<16x32xf32>
    %279 = arith.select %276, %277, %278 : vector<16x32xi1>, vector<16x32xf32>
    %280 = vector.broadcast %5 : vector<1x2xf32> to vector<16x2xf32>
    %281 = arith.mulf %280, %250 : vector<16x2xf32>
    %282 = vector.extract_strided_slice %261 {offsets = [0, 32], sizes = [16, 2], strides = [1, 1]} : vector<16x34xf32> to vector<16x2xf32>
    %283 = arith.addf %281, %282 : vector<16x2xf32>
    %284 = vector.broadcast %6 : vector<1x2xf32> to vector<16x2xf32>
    %285 = arith.mulf %284, %255 : vector<16x2xf32>
    %286 = vector.broadcast %10 : vector<1x2xf32> to vector<16x2xf32>
    %287 = arith.mulf %286, %283 : vector<16x2xf32>
    %288 = arith.addf %285, %287 : vector<16x2xf32>
    %289 = tpu.concatenate %279, %288, %46 in 1 : vector<16x32xf32>, vector<16x2xf32>, vector<16x94xf32> -> vector<16x128xf32>
    %c7 = arith.constant 7 : index
    %c0_98 = arith.constant 0 : index
    %c0_99 = arith.constant 0 : index
    %290 = vector.load %arg9[%c7, %c0_98, %c0_99] : memref<8x16x128xf32, #tpu.memory_space<vmem>>, vector<1x16x128xf32>
    %291 = vector.shape_cast %290 : vector<1x16x128xf32> to vector<16x128xf32>
    %292 = vector.shape_cast %289 : vector<16x128xf32> to vector<1x16x128xf32>
    tpu.vector_store %arg9[%c7, %c0_98, %c0_99], %292 {strides = array<i32>} : memref<8x16x128xf32, #tpu.memory_space<vmem>>, vector<1x16x128xf32>,
    return
  }
  func.func @transform_0(%arg0: i32) -> (i32, i32, i32) {
    %c0_i32 = arith.constant 0 : i32
    %c0_i32_0 = arith.constant 0 : i32
    %c0_i32_1 = arith.constant 0 : i32
    return %c0_i32, %arg0, %c0_i32_0 : i32, i32, i32
  }
  func.func @transform_1(%arg0: i32) -> (i32, i32) {
    %c0_i32 = arith.constant 0 : i32
    %c0_i32_0 = arith.constant 0 : i32
    %c0_i32_1 = arith.constant 0 : i32
    return %c0_i32, %c0_i32_0 : i32, i32
  }
  func.func @transform_2(%arg0: i32) -> (i32, i32) {
    %c0_i32 = arith.constant 0 : i32
    %c0_i32_0 = arith.constant 0 : i32
    %c0_i32_1 = arith.constant 0 : i32
    return %c0_i32, %c0_i32_0 : i32, i32
  }
  func.func @transform_3(%arg0: i32) -> (i32, i32) {
    %c0_i32 = arith.constant 0 : i32
    %c0_i32_0 = arith.constant 0 : i32
    %c0_i32_1 = arith.constant 0 : i32
    return %c0_i32, %c0_i32_0 : i32, i32
  }
  func.func @transform_4(%arg0: i32) -> (i32, i32) {
    %c0_i32 = arith.constant 0 : i32
    %c0_i32_0 = arith.constant 0 : i32
    %c0_i32_1 = arith.constant 0 : i32
    return %c0_i32, %c0_i32_0 : i32, i32
  }
  func.func @transform_5(%arg0: i32) -> (i32, i32) {
    %c0_i32 = arith.constant 0 : i32
    %c0_i32_0 = arith.constant 0 : i32
    %c0_i32_1 = arith.constant 0 : i32
    return %c0_i32, %c0_i32_0 : i32, i32
  }
  func.func @transform_6(%arg0: i32) -> (i32, i32) {
    %c0_i32 = arith.constant 0 : i32
    %c0_i32_0 = arith.constant 0 : i32
    %c0_i32_1 = arith.constant 0 : i32
    return %c0_i32, %c0_i32_0 : i32, i32
  }
  func.func @transform_7(%arg0: i32) -> (i32, i32) {
    %c0_i32 = arith.constant 0 : i32
    %c0_i32_0 = arith.constant 0 : i32
    %c0_i32_1 = arith.constant 0 : i32
    return %c0_i32, %c0_i32_0 : i32, i32
  }
  func.func @transform_8(%arg0: i32) -> (i32, i32, i32) {
    %c0_i32 = arith.constant 0 : i32
    %c0_i32_0 = arith.constant 0 : i32
    %c0_i32_1 = arith.constant 0 : i32
    return %c0_i32, %arg0, %c0_i32_0 : i32, i32, i32
  }
}

</mosaic_0001>

<llo_original>
// kernel: tiny_rsnn_forward.1
$region0: #{tiny_rsnn_forward.1}
  #allocation0 [shape = 'u32[]', space=smem, size = 0x4, offset = 0x4, fixed_abs, tag = 'smem constant byte address 0x4 - core index']
  #allocation1 [shape = 'u32[144,128]{1,0:T(1,128)}', space=vmem, size = 0x12000, scoped, tag = 'internal scratch']
  %s0 = inlined_call_operand.vmem [shape: bf16[8,32,16], index: 0, kind: input, shape index: {}]
  %s1 = inlined_call_operand.vmem [shape: bf16[16,32], index: 1, kind: input, shape index: {}]
  %s2 = inlined_call_operand.vmem [shape: bf16[32,34], index: 2, kind: input, shape index: {}]
  %s3 = inlined_call_operand.vmem [shape: f32[1,32], index: 3, kind: input, shape index: {}]
  %s4 = inlined_call_operand.vmem [shape: f32[1,32], index: 4, kind: input, shape index: {}]
  %s5 = inlined_call_operand.vmem [shape: f32[1,32], index: 5, kind: input, shape index: {}]
  %s6 = inlined_call_operand.vmem [shape: f32[1,2], index: 6, kind: input, shape index: {}]
  %s7 = inlined_call_operand.vmem [shape: f32[1,2], index: 7, kind: input, shape index: {}]
  %s8 = inlined_call_operand.vmem [shape: f32[8,32,128], index: 8, kind: output, shape index: {}]
  %s9 = sld [smem:[#allocation0]]
  $region140: #{tiny_rsnn_forward.1} parent=0
    _
  %s11 = ssub.s32 1, %s9
  %s12 = scalar_select 0, %s11, %s9
  $region1: #{tiny_rsnn_forward.1} parent=0
    #allocation2 [shape = 'u8[65536]{0}', space=vmem, size = 0x10000, scoped, tag = 'input window, operand 0']
    #allocation3 [shape = 'u8[131072]{0}', space=vmem, size = 0x20000, scoped, tag = 'output window, operand 0']
    loop: start=0, step=1, limit=4
    $region2: #{tiny_rsnn_forward.1} parent=1 // loop_pre_header
      _
    $region3: #{tiny_rsnn_forward.1} parent=1 // loop_header
      %s14 = sphi 0, %s18
      %p15 = scmp.ge.s32.totalorder %s14, 4
      %s24 = sphi 0, %s26
      %s27 = sphi 0, %s24
      %s28 = sphi 0, %s27
      %s44 = sphi 0, %s28
      %s48 = sphi 0, %s48
      %s50 = sphi 0, %s48
      %s51 = sphi 0, %s50
      %s65 = sphi 0, %s51
      %s69 = sphi 0, %s69
      %s71 = sphi 0, %s69
      %s72 = sphi 0, %s71
      %s86 = sphi 0, %s72
      %s90 = sphi 0, %s90
      %s92 = sphi 0, %s90
      %s93 = sphi 0, %s92
      %s107 = sphi 0, %s93
      %s111 = sphi 0, %s111
      %s113 = sphi 0, %s111
      %s114 = sphi 0, %s113
      %s128 = sphi 0, %s114
      %s132 = sphi 0, %s132
      %s134 = sphi 0, %s132
      %s135 = sphi 0, %s134
      %s149 = sphi 0, %s135
      %s153 = sphi 0, %s153
      %s155 = sphi 0, %s153
      %s156 = sphi 0, %s155
      %s170 = sphi 0, %s156
      %s174 = sphi 0, %s174
      %s176 = sphi 0, %s174
      %s177 = sphi 0, %s176
      %s191 = sphi 0, %s177
      %s197 = sphi 0, %s199
      %s200 = sphi 0, %s197
      %s201 = sphi 0, %s200
      %s217 = sphi 0, %s201
    $region4: #{tiny_rsnn_forward.1} parent=1 // loop_header_branch
      %17 = sbr.rel (%p15) target = $region8
    $region5: #{tiny_rsnn_forward.1} parent=1 // loop_body
      %s19 = ssub.s32 %s14, 1
      %s20 = ssub.s32 %s14, 2
      %s21 = sadd.s32 %s14, 1
      %s22 = ssub.s32 %s14, %s21
      %p23 = scmp.eq.s32.totalorder %s22, 0
      %s25 = sadd.s32 %s24, 1
      %s26 = scalar_select %p23, %s24, %s25
      %p29 = pneg %p23
      %p30 = scmp.eq.s32.totalorder %s14, 1
      %p31 = por %p29, %p30
      %p32 = scmp.ne.s32.totalorder %s24, %s27
      %p33 = scmp.eq.s32.totalorder %s14, 0
      %p34 = por %p32, %p33
      %p35 = scmp.ne.s32.totalorder %s24, %s27
      %p36 = scmp.eq.s32.totalorder %s19, 1
      %p37 = por %p35, %p36
      %p38 = scmp.ne.s32.totalorder %s27, %s28
      %p39 = scmp.eq.s32.totalorder %s19, 0
      %p40 = por %p38, %p39
      %p41 = scmp.ne.s32.totalorder %s27, %s28
      %p42 = scmp.eq.s32.totalorder %s20, 1
      %p43 = por %p41, %p42
      %p45 = scmp.ne.s32.totalorder %s28, %s44
      %p46 = scmp.eq.s32.totalorder %s20, 0
      %p47 = por %p45, %p46
      %s49 = sadd.s32 %s48, 1
      %p52 = scmp.eq.s32.totalorder %s14, 1
      %p53 = scmp.ne.s32.totalorder %s48, %s50
      %p54 = scmp.eq.s32.totalorder %s14, 0
      %p55 = por %p53, %p54
      %p56 = scmp.ne.s32.totalorder %s48, %s50
      %p57 = scmp.eq.s32.totalorder %s19, 1
      %p58 = por %p56, %p57
      %p59 = scmp.ne.s32.totalorder %s50, %s51
      %p60 = scmp.eq.s32.totalorder %s19, 0
      %p61 = por %p59, %p60
      %p62 = scmp.ne.s32.totalorder %s50, %s51
      %p63 = scmp.eq.s32.totalorder %s20, 1
      %p64 = por %p62, %p63
      %p66 = scmp.ne.s32.totalorder %s51, %s65
      %p67 = scmp.eq.s32.totalorder %s20, 0
      %p68 = por %p66, %p67
      %s70 = sadd.s32 %s69, 1
      %p73 = scmp.eq.s32.totalorder %s14, 1
      %p74 = scmp.ne.s32.totalorder %s69, %s71
      %p75 = scmp.eq.s32.totalorder %s14, 0
      %p76 = por %p74, %p75
      %p77 = scmp.ne.s32.totalorder %s69, %s71
      %p78 = scmp.eq.s32.totalorder %s19, 1
      %p79 = por %p77, %p78
      %p80 = scmp.ne.s32.totalorder %s71, %s72
      %p81 = scmp.eq.s32.totalorder %s19, 0
      %p82 = por %p80, %p81
      %p83 = scmp.ne.s32.totalorder %s71, %s72
      %p84 = scmp.eq.s32.totalorder %s20, 1
      %p85 = por %p83, %p84
      %p87 = scmp.ne.s32.totalorder %s72, %s86
      %p88 = scmp.eq.s32.totalorder %s20, 0
      %p89 = por %p87, %p88
      %s91 = sadd.s32 %s90, 1
      %p94 = scmp.eq.s32.totalorder %s14, 1
      %p95 = scmp.ne.s32.totalorder %s90, %s92
      %p96 = scmp.eq.s32.totalorder %s14, 0
      %p97 = por %p95, %p96
      %p98 = scmp.ne.s32.totalorder %s90, %s92
      %p99 = scmp.eq.s32.totalorder %s19, 1
      %p100 = por %p98, %p99
      %p101 = scmp.ne.s32.totalorder %s92, %s93
      %p102 = scmp.eq.s32.totalorder %s19, 0
      %p103 = por %p101, %p102
      %p104 = scmp.ne.s32.totalorder %s92, %s93
      %p105 = scmp.eq.s32.totalorder %s20, 1
      %p106 = por %p104, %p105
      %p108 = scmp.ne.s32.totalorder %s93, %s107
      %p109 = scmp.eq.s32.totalorder %s20, 0
      %p110 = por %p108, %p109
      %s112 = sadd.s32 %s111, 1
      %p115 = scmp.eq.s32.totalorder %s14, 1
      %p116 = scmp.ne.s32.totalorder %s111, %s113
      %p117 = scmp.eq.s32.totalorder %s14, 0
      %p118 = por %p116, %p117
      %p119 = scmp.ne.s32.totalorder %s111, %s113
      %p120 = scmp.eq.s32.totalorder %s19, 1
      %p121 = por %p119, %p120
      %p122 = scmp.ne.s32.totalorder %s113, %s114
      %p123 = scmp.eq.s32.totalorder %s19, 0
      %p124 = por %p122, %p123
      %p125 = scmp.ne.s32.totalorder %s113, %s114
      %p126 = scmp.eq.s32.totalorder %s20, 1
      %p127 = por %p125, %p126
      %p129 = scmp.ne.s32.totalorder %s114, %s128
      %p130 = scmp.eq.s32.totalorder %s20, 0
      %p131 = por %p129, %p130
      %s133 = sadd.s32 %s132, 1
      %p136 = scmp.eq.s32.totalorder %s14, 1
      %p137 = scmp.ne.s32.totalorder %s132, %s134
      %p138 = scmp.eq.s32.totalorder %s14, 0
      %p139 = por %p137, %p138
      %p140 = scmp.ne.s32.totalorder %s132, %s134
      %p141 = scmp.eq.s32.totalorder %s19, 1
      %p142 = por %p140, %p141
      %p143 = scmp.ne.s32.totalorder %s134, %s135
      %p144 = scmp.eq.s32.totalorder %s19, 0
      %p145 = por %p143, %p144
      %p146 = scmp.ne.s32.totalorder %s134, %s135
      %p147 = scmp.eq.s32.totalorder %s20, 1
      %p148 = por %p146, %p147
      %p150 = scmp.ne.s32.totalorder %s135, %s149
      %p151 = scmp.eq.s32.totalorder %s20, 0
      %p152 = por %p150, %p151
      %s154 = sadd.s32 %s153, 1
      %p157 = scmp.eq.s32.totalorder %s14, 1
      %p158 = scmp.ne.s32.totalorder %s153, %s155
      %p159 = scmp.eq.s32.totalorder %s14, 0
      %p160 = por %p158, %p159
      %p161 = scmp.ne.s32.totalorder %s153, %s155
      %p162 = scmp.eq.s32.totalorder %s19, 1
      %p163 = por %p161, %p162
      %p164 = scmp.ne.s32.totalorder %s155, %s156
      %p165 = scmp.eq.s32.totalorder %s19, 0
      %p166 = por %p164, %p165
      %p167 = scmp.ne.s32.totalorder %s155, %s156
      %p168 = scmp.eq.s32.totalorder %s20, 1
      %p169 = por %p167, %p168
      %p171 = scmp.ne.s32.totalorder %s156, %s170
      %p172 = scmp.eq.s32.totalorder %s20, 0
      %p173 = por %p171, %p172
      %s175 = sadd.s32 %s174, 1
      %p178 = scmp.eq.s32.totalorder %s14, 1
      %p179 = scmp.ne.s32.totalorder %s174, %s176
      %p180 = scmp.eq.s32.totalorder %s14, 0
      %p181 = por %p179, %p180
      %p182 = scmp.ne.s32.totalorder %s174, %s176
      %p183 = scmp.eq.s32.totalorder %s19, 1
      %p184 = por %p182, %p183
      %p185 = scmp.ne.s32.totalorder %s176, %s177
      %p186 = scmp.eq.s32.totalorder %s19, 0
      %p187 = por %p185, %p186
      %p188 = scmp.ne.s32.totalorder %s176, %s177
      %p189 = scmp.eq.s32.totalorder %s20, 1
      %p190 = por %p188, %p189
      %p192 = scmp.ne.s32.totalorder %s177, %s191
      %p193 = scmp.eq.s32.totalorder %s20, 0
      %p194 = por %p192, %p193
      %s195 = ssub.s32 %s14, %s21
      %p196 = scmp.eq.s32.totalorder %s195, 0
      %s198 = sadd.s32 %s197, 1
      %s199 = scalar_select %p196, %s197, %s198
      %p202 = pneg %p196
      %p203 = scmp.eq.s32.totalorder %s14, 1
      %p204 = por %p202, %p203
      %p205 = scmp.ne.s32.totalorder %s197, %s200
      %p206 = scmp.eq.s32.totalorder %s14, 0
      %p207 = por %p205, %p206
      %p208 = scmp.ne.s32.totalorder %s197, %s200
      %p209 = scmp.eq.s32.totalorder %s19, 1
      %p210 = por %p208, %p209
      %p211 = scmp.ne.s32.totalorder %s200, %s201
      %p212 = scmp.eq.s32.totalorder %s19, 0
      %p213 = por %p211, %p212
      %p214 = scmp.ne.s32.totalorder %s200, %s201
      %p215 = scmp.eq.s32.totalorder %s20, 1
      %p216 = por %p214, %p215
      %p218 = scmp.ne.s32.totalorder %s201, %s217
      %p219 = scmp.eq.s32.totalorder %s20, 0
      %p220 = por %p218, %p219
      %p221 = scmp.le.s32.totalorder 1, %s14
      %p222 = scmp.lt.s32.totalorder %s14, 3
      %p223 = pnand %p221, %p222
      %p224 = pneg %p223
      // Predicated region
      $region9: #{tiny_rsnn_forward.1} parent=5 // pred_check
        _
      $region10: #{tiny_rsnn_forward.1} parent=5 // pred_check_branch
        %226 = sbr.rel (%p223) target = $region12
      $region11: #{tiny_rsnn_forward.1} parent=5 // pred_region
        %s227 = ssub.s32 %s14, 1
        // Predicated region
        $region13: #{tiny_rsnn_forward.1} parent=11 // pred_check
          %p228 = pneg %p61
        $region14: #{tiny_rsnn_forward.1} parent=11 // pred_check_branch
          %230 = sbr.rel (%p228) target = $region16
        $region15: #{tiny_rsnn_forward.1} parent=11 // pred_region
          _
        $region16: #{tiny_rsnn_forward.1} parent=11 // pred_fallthru
          _
        // Predicated region
        $region17: #{tiny_rsnn_forward.1} parent=11 // pred_check
          %p231 = pneg %p82
        $region18: #{tiny_rsnn_forward.1} parent=11 // pred_check_branch
          %233 = sbr.rel (%p231) target = $region20
        $region19: #{tiny_rsnn_forward.1} parent=11 // pred_region
          _
        $region20: #{tiny_rsnn_forward.1} parent=11 // pred_fallthru
          _
        // Predicated region
        $region21: #{tiny_rsnn_forward.1} parent=11 // pred_check
          %p234 = pneg %p103
        $region22: #{tiny_rsnn_forward.1} parent=11 // pred_check_branch
          %236 = sbr.rel (%p234) target = $region24
        $region23: #{tiny_rsnn_forward.1} parent=11 // pred_region
          _
        $region24: #{tiny_rsnn_forward.1} parent=11 // pred_fallthru
          _
        // Predicated region
        $region25: #{tiny_rsnn_forward.1} parent=11 // pred_check
          %p237 = pneg %p124
        $region26: #{tiny_rsnn_forward.1} parent=11 // pred_check_branch
          %239 = sbr.rel (%p237) target = $region28
        $region27: #{tiny_rsnn_forward.1} parent=11 // pred_region
          _
        $region28: #{tiny_rsnn_forward.1} parent=11 // pred_fallthru
          _
        // Predicated region
        $region29: #{tiny_rsnn_forward.1} parent=11 // pred_check
          %p240 = pneg %p145
        $region30: #{tiny_rsnn_forward.1} parent=11 // pred_check_branch
          %242 = sbr.rel (%p240) target = $region32
        $region31: #{tiny_rsnn_forward.1} parent=11 // pred_region
          _
        $region32: #{tiny_rsnn_forward.1} parent=11 // pred_fallthru
          _
        // Predicated region
        $region33: #{tiny_rsnn_forward.1} parent=11 // pred_check
          %p243 = pneg %p166
        $region34: #{tiny_rsnn_forward.1} parent=11 // pred_check_branch
          %245 = sbr.rel (%p243) target = $region36
        $region35: #{tiny_rsnn_forward.1} parent=11 // pred_region
          _
        $region36: #{tiny_rsnn_forward.1} parent=11 // pred_fallthru
          _
        // Predicated region
        $region37: #{tiny_rsnn_forward.1} parent=11 // pred_check
          %p246 = pneg %p187
        $region38: #{tiny_rsnn_forward.1} parent=11 // pred_check_branch
          %248 = sbr.rel (%p246) target = $region40
        $region39: #{tiny_rsnn_forward.1} parent=11 // pred_region
          _
        $region40: #{tiny_rsnn_forward.1} parent=11 // pred_fallthru
          _
      $region12: #{tiny_rsnn_forward.1} parent=5 // pred_fallthru
        _
      %p249 = scmp.lt.s32.totalorder %s14, 2
      // Predicated region
      $region41: #{tiny_rsnn_forward.1} parent=5 // pred_check
        %p250 = pneg %p249
      $region42: #{tiny_rsnn_forward.1} parent=5 // pred_check_branch
        %252 = sbr.rel (%p250) target = $region44
      $region43: #{tiny_rsnn_forward.1} parent=5 // pred_region
        // Predicated region
        $region45: #{tiny_rsnn_forward.1} parent=43 // pred_check
          %p253 = pneg %p34
        $region46: #{tiny_rsnn_forward.1} parent=43 // pred_check_branch
          %255 = sbr.rel (%p253) target = $region48
        $region47: #{tiny_rsnn_forward.1} parent=43 // pred_region
          %s256 = sand.u32 %s24, 1
          %s257 = sand.u32 %s24, 1
          %s258 = smul.addr %s257, 64
          %s259 = scalar_lea.vmem [#allocation2], %s258
          %s260 = smul.u32 2, %s14
          %s261 = smul.addr %s260, 4
          %s262 = scalar_lea.vmem %s0, %s261
          // Predicated region
          $region49: #{tiny_rsnn_forward.1} parent=47 // pred_check
            _
          $region50: #{tiny_rsnn_forward.1} parent=47 // pred_check_branch
            %264 = sbr.rel (0) target = $region52
          $region51: #{tiny_rsnn_forward.1} parent=47 // pred_region
            // Predicated region
            $region53: #{tiny_rsnn_forward.1} parent=51 // pred_check
              _
            $region54: #{tiny_rsnn_forward.1} parent=51 // pred_check_branch
              %266 = sbr.rel target = $region56
            $region55: #{tiny_rsnn_forward.1} parent=51 // pred_region
              // Predicated region
              $region68: #{tiny_rsnn_forward.1} parent=55 // pred_check
                _
              $region69: #{tiny_rsnn_forward.1} parent=55 // pred_check_branch
                %311 = sbr.rel (0) target = $region71
              $region70: #{tiny_rsnn_forward.1} parent=55 // pred_region
                loop: start=0, step=1, limit=1
                $region72: #{tiny_rsnn_forward.1} parent=70 // loop_pre_header
                  _
                $region73: #{tiny_rsnn_forward.1} parent=70 // loop_header
                  %s313 = sphi 0, %s317
                  %p314 = scmp.ge.s32.totalorder %s313, 1
                  %s318 = sphi %s262, %s262
                  %s319 = sphi %s259, %s259
                $region74: #{tiny_rsnn_forward.1} parent=70 // loop_header_branch
                  %316 = sbr.rel (%p314) target = $region78
                $region75: #{tiny_rsnn_forward.1} parent=70 // loop_body
                  _
                $region76: #{tiny_rsnn_forward.1} parent=70 // loop_footer
                  %s317 = sadd.s32 1, %s313
                $region77: #{tiny_rsnn_forward.1} parent=70 // loop_footer_branch
                  %312 = sbr.rel target = $region73
                $region78: #{tiny_rsnn_forward.1} parent=70 // loop_exit
                  _
                loop: start=0, step=1, limit=1
                $region79: #{tiny_rsnn_forward.1} parent=70 // loop_pre_header
                  _
                $region80: #{tiny_rsnn_forward.1} parent=70 // loop_header
                  %s322 = sphi 0, %s326
                  %p323 = scmp.ge.s32.totalorder %s322, 1
                  %s327 = sphi %s262, %s262
                  %s328 = sphi %s259, %s259
                $region81: #{tiny_rsnn_forward.1} parent=70 // loop_header_branch
                  %325 = sbr.rel (%p323) target = $region85
                $region82: #{tiny_rsnn_forward.1} parent=70 // loop_body
                  %v329 = vld [vmem:[%s327] sm:$0xf]
                  %330 = vst [vmem:[%s328] sm:$0xf] %v329
                  %v331 = vld [vmem:[%s327 + $0x4] sm:$0xf]
                  %332 = vst [vmem:[%s328 + $0x4] sm:$0xf] %v331
                  %v333 = vld [vmem:[%s327 + $0x10] sm:$0xf]
                  %334 = vst [vmem:[%s328 + $0x8] sm:$0xf] %v333
                  %v335 = vld [vmem:[%s327 + $0x14] sm:$0xf]
                  %336 = vst [vmem:[%s328 + $0xc] sm:$0xf] %v335
                  %v337 = vld [vmem:[%s327 + $0x20] sm:$0xf]
                  %338 = vst [vmem:[%s328 + $0x10] sm:$0xf] %v337
                  %v339 = vld [vmem:[%s327 + $0x24] sm:$0xf]
                  %340 = vst [vmem:[%s328 + $0x14] sm:$0xf] %v339
                  %v341 = vld [vmem:[%s327 + $0x30] sm:$0xf]
                  %342 = vst [vmem:[%s328 + $0x18] sm:$0xf] %v341
                  %v343 = vld [vmem:[%s327 + $0x34] sm:$0xf]
                  %344 = vst [vmem:[%s328 + $0x1c] sm:$0xf] %v343
                  %v345 = vld [vmem:[%s327 + $0x40] sm:$0xf]
                  %346 = vst [vmem:[%s328 + $0x20] sm:$0xf] %v345
                  %v347 = vld [vmem:[%s327 + $0x44] sm:$0xf]
                  %348 = vst [vmem:[%s328 + $0x24] sm:$0xf] %v347
                  %v349 = vld [vmem:[%s327 + $0x50] sm:$0xf]
                  %350 = vst [vmem:[%s328 + $0x28] sm:$0xf] %v349
                  %v351 = vld [vmem:[%s327 + $0x54] sm:$0xf]
                  %352 = vst [vmem:[%s328 + $0x2c] sm:$0xf] %v351
                  %v353 = vld [vmem:[%s327 + $0x60] sm:$0xf]
                  %354 = vst [vmem:[%s328 + $0x30] sm:$0xf] %v353
                  %v355 = vld [vmem:[%s327 + $0x64] sm:$0xf]
                  %356 = vst [vmem:[%s328 + $0x34] sm:$0xf] %v355
                  %v357 = vld [vmem:[%s327 + $0x70] sm:$0xf]
                  %358 = vst [vmem:[%s328 + $0x38] sm:$0xf] %v357
                  %v359 = vld [vmem:[%s327 + $0x74] sm:$0xf]
                  %360 = vst [vmem:[%s328 + $0x3c] sm:$0xf] %v359
                $region83: #{tiny_rsnn_forward.1} parent=70 // loop_footer
                  %s326 = sadd.s32 1, %s322
                $region84: #{tiny_rsnn_forward.1} parent=70 // loop_footer_branch
                  %321 = sbr.rel target = $region80
                $region85: #{tiny_rsnn_forward.1} parent=70 // loop_exit
                  _
              $region71: #{tiny_rsnn_forward.1} parent=55 // pred_fallthru
                _
            $region56: #{tiny_rsnn_forward.1} parent=51 // pred_fallthru
              _
            // Predicated region
            $region57: #{tiny_rsnn_forward.1} parent=51 // pred_check
              _
            $region58: #{tiny_rsnn_forward.1} parent=51 // pred_check_branch
              %268 = sbr.rel (0) target = $region60
            $region59: #{tiny_rsnn_forward.1} parent=51 // pred_region
              loop: start=0, step=1, limit=1
              $region61: #{tiny_rsnn_forward.1} parent=59 // loop_pre_header
                _
              $region62: #{tiny_rsnn_forward.1} parent=59 // loop_header
                %s271 = sphi 0, %s275
                %p272 = scmp.ge.s32.totalorder %s271, 1
                %s276 = sphi %s262, %s262
                %s277 = sphi %s259, %s259
              $region63: #{tiny_rsnn_forward.1} parent=59 // loop_header_branch
                %274 = sbr.rel (%p272) target = $region67
              $region64: #{tiny_rsnn_forward.1} parent=59 // loop_body
                %v278 = vld [vmem:[%s276] sm:$0xf]
                %279 = vst [vmem:[%s277] sm:$0xf] %v278
                %v280 = vld [vmem:[%s276 + $0x4] sm:$0xf]
                %281 = vst [vmem:[%s277 + $0x4] sm:$0xf] %v280
                %v282 = vld [vmem:[%s276 + $0x10] sm:$0xf]
                %283 = vst [vmem:[%s277 + $0x8] sm:$0xf] %v282
                %v284 = vld [vmem:[%s276 + $0x14] sm:$0xf]
                %285 = vst [vmem:[%s277 + $0xc] sm:$0xf] %v284
                %v286 = vld [vmem:[%s276 + $0x20] sm:$0xf]
                %287 = vst [vmem:[%s277 + $0x10] sm:$0xf] %v286
                %v288 = vld [vmem:[%s276 + $0x24] sm:$0xf]
                %289 = vst [vmem:[%s277 + $0x14] sm:$0xf] %v288
                %v290 = vld [vmem:[%s276 + $0x30] sm:$0xf]
                %291 = vst [vmem:[%s277 + $0x18] sm:$0xf] %v290
                %v292 = vld [vmem:[%s276 + $0x34] sm:$0xf]
                %293 = vst [vmem:[%s277 + $0x1c] sm:$0xf] %v292
                %v294 = vld [vmem:[%s276 + $0x40] sm:$0xf]
                %295 = vst [vmem:[%s277 + $0x20] sm:$0xf] %v294
                %v296 = vld [vmem:[%s276 + $0x44] sm:$0xf]
                %297 = vst [vmem:[%s277 + $0x24] sm:$0xf] %v296
                %v298 = vld [vmem:[%s276 + $0x50] sm:$0xf]
                %299 = vst [vmem:[%s277 + $0x28] sm:$0xf] %v298
                %v300 = vld [vmem:[%s276 + $0x54] sm:$0xf]
                %301 = vst [vmem:[%s277 + $0x2c] sm:$0xf] %v300
                %v302 = vld [vmem:[%s276 + $0x60] sm:$0xf]
                %303 = vst [vmem:[%s277 + $0x30] sm:$0xf] %v302
                %v304 = vld [vmem:[%s276 + $0x64] sm:$0xf]
                %305 = vst [vmem:[%s277 + $0x34] sm:$0xf] %v304
                %v306 = vld [vmem:[%s276 + $0x70] sm:$0xf]
                %307 = vst [vmem:[%s277 + $0x38] sm:$0xf] %v306
                %v308 = vld [vmem:[%s276 + $0x74] sm:$0xf]
                %309 = vst [vmem:[%s277 + $0x3c] sm:$0xf] %v308
              $region65: #{tiny_rsnn_forward.1} parent=59 // loop_footer
                %s275 = sadd.s32 1, %s271
              $region66: #{tiny_rsnn_forward.1} parent=59 // loop_footer_branch
                %270 = sbr.rel target = $region62
              $region67: #{tiny_rsnn_forward.1} parent=59 // loop_exit
                _
            $region60: #{tiny_rsnn_forward.1} parent=51 // pred_fallthru
              _
          $region52: #{tiny_rsnn_forward.1} parent=47 // pred_fallthru
            _
          %361 = vnop
        $region48: #{tiny_rsnn_forward.1} parent=43 // pred_fallthru
          _
      $region44: #{tiny_rsnn_forward.1} parent=5 // pred_fallthru
        _
      %p362 = scmp.le.s32.totalorder 1, %s14
      %p363 = scmp.lt.s32.totalorder %s14, 3
      %p364 = pnand %p362, %p363
      %p365 = pneg %p364
      // Predicated region
      $region86: #{tiny_rsnn_forward.1} parent=5 // pred_check
        _
      $region87: #{tiny_rsnn_forward.1} parent=5 // pred_check_branch
        %367 = sbr.rel (%p364) target = $region89
      $region88: #{tiny_rsnn_forward.1} parent=5 // pred_region
        %s368 = ssub.s32 %s14, 1
        %s369 = sand.u32 %s27, 1
        %s370 = sand.u32 %s27, 1
        %s371 = smul.addr %s370, 64
        %s372 = scalar_lea.vmem [#allocation2], %s371
        // Predicated region
        $region90: #{tiny_rsnn_forward.1} parent=88 // pred_check
          %p373 = pneg %p40
        $region91: #{tiny_rsnn_forward.1} parent=88 // pred_check_branch
          %375 = sbr.rel (%p373) target = $region93
        $region92: #{tiny_rsnn_forward.1} parent=88 // pred_region
          _
        $region93: #{tiny_rsnn_forward.1} parent=88 // pred_fallthru
          _
        %s376 = sand.u32 %s27, 1
        %s377 = sand.u32 %s27, 1
        %s378 = smul.addr %s377, 64
        %s379 = scalar_lea.vmem [#allocation2], %s378
        %p380 = pneg %p40
        %p381 = pneg %p37
        %p382 = pneg %p61
        %p383 = pneg %p58
        %p384 = pneg %p82
        %p385 = pneg %p79
        %p386 = pneg %p103
        %p387 = pneg %p100
        %p388 = pneg %p124
        %p389 = pneg %p121
        %p390 = pneg %p145
        %p391 = pneg %p142
        %p392 = pneg %p166
        %p393 = pneg %p163
        %p394 = pneg %p187
        %p395 = pneg %p184
        %p396 = pneg %p213
        %p397 = pneg %p210
        %s398 = sand.u32 %s200, 1
        %s399 = sand.u32 %s200, 1
        %s400 = smul.addr %s399, 128
        %s401 = scalar_lea.vmem [#allocation3], %s400
        %s402 = smul.u32 2, %s19
        %s403 = smul.u32 2, %s19
        %v405 = vld [vmem:[%s1] sm:$0xf]
        %v406 = vld [vmem:[%s1 + $0x4] sm:$0xf]
        %v407 = vld [vmem:[%s2] sm:$0xf]
        %v408 = vld [vmem:[%s2 + $0x4] sm:$0xf]
        %v409 = vld [vmem:[%s2 + $0x8] sm:$0xf]
        %v410 = vld [vmem:[%s2 + $0xc] sm:$0xf]
        %v411 = vld [vmem:[%s3] sm:$0x1]
        %v412 = vld [vmem:[%s4] sm:$0x1]
        %v413 = vld [vmem:[%s5] sm:$0x1]
        %v414 = vld [vmem:[%s6] sm:$0x1]
        %v415 = vld [vmem:[%s7] sm:$0x1]
        %v416 = vsub.f32 1.0, %v413
        %v417 = vsub.f32 1.0, %v415
        %v418 = vld [vmem:[%s372] sm:$0xf]
        %v419 = vld [vmem:[%s372 + $0x4] sm:$0xf]
        %v421 = vlaneseq
        %v422 = vshrl.u32 %v421, 7
        %v423 = vsub.s32 0, %v422
        %v424 = vrot.slane %v411, %v423
        %v428 = vunpack.c.l.b16 %v418
        %v429 = vunpack.c.l.b16 %v419
        %v430 = vpack.c.b16 %v429, %v428
        %v433 = vunpack.c.l.b16 %v405
        %v434 = vunpack.c.l.b16 %v406
        %v435 = vpack.c.b16 %v434, %v433
        %vm437 = vcmask 130048
        %v439 = vsel %vm437, %v430, 0
        %441 = vmatprep.subr.bf16.mxu0 0
        %442 = vmatpush1.bf16.msra.mxu0 %v435
        %443 = vmatprep.subr.bf16.mxu0 0
        %444 = vmatpush1.bf16.msra.mxu0 0
        %445 = vmatprep.subr.bf16.mxu0 0
        %446 = vmatpush1.bf16.msra.mxu0 0
        %447 = vmatprep.subr.bf16.mxu0 0
        %448 = vmatpush1.bf16.msra.mxu0 0
        %449 = vmatprep.subr.bf16.mxu0 0
        %450 = vmatpush1.bf16.msra.mxu0 0
        %451 = vmatprep.subr.bf16.mxu0 0
        %452 = vmatpush1.bf16.msra.mxu0 0
        %453 = vmatprep.subr.bf16.mxu0 0
        %454 = vmatpush1.bf16.msra.mxu0 0
        %455 = vmatprep.subr.bf16.mxu0 0
        %456 = vmatpush1.bf16.msra.mxu0 0
        %457 = vmatprep.subr.bf16.mxu0 0
        %458 = vmatpush1.bf16.msra.mxu0 0
        %459 = vmatprep.subr.bf16.mxu0 0
        %460 = vmatpush1.bf16.msra.mxu0 0
        %461 = vmatprep.subr.bf16.mxu0 0
        %462 = vmatpush1.bf16.msra.mxu0 0
        %463 = vmatprep.subr.bf16.mxu0 0
        %464 = vmatpush1.bf16.msra.mxu0 0
        %465 = vmatprep.subr.bf16.mxu0 0
        %466 = vmatpush1.bf16.msra.mxu0 0
        %467 = vmatprep.subr.bf16.mxu0 0
        %468 = vmatpush1.bf16.msra.mxu0 0
        %469 = vmatprep.subr.bf16.mxu0 0
        %470 = vmatpush1.bf16.msra.mxu0 0
        %471 = vmatprep.subr.bf16.mxu0 0
        %472 = vmatpush1.bf16.msra.mxu0 0
        %473 = vmatprep.mubr.bf16.mxu0 0
        %474 = vmatmul.mubr.bf16.gmra.mrb[0].mxu0 %v439
        %v475 = vpop.f32.mrb[0].mxu0
        %v476 = vadd.f32 %v424, %v475
        %v477 = vpop.f32.mrb[0].mxu0
        %v478 = vpop.f32.mrb[0].mxu0
        %v479 = vadd.f32 %v424, %v478
        %v480 = vpop.f32.mrb[0].mxu0
        %481 = vdwg.mxu0
        %s482 = scalar_lea.vmem %s372, 8 [#allocation2]
        %v483 = vld [vmem:[%s482] sm:$0xf]
        %v484 = vld [vmem:[%s482 + $0x4] sm:$0xf]
        %v487 = vunpack.c.l.b16 %v483
        %v488 = vunpack.c.l.b16 %v484
        %v489 = vpack.c.b16 %v488, %v487
        %v491 = vsel %vm437, %v489, 0
        %493 = vmatprep.subr.bf16.mxu0 0
        %494 = vmatpush1.bf16.msra.mxu0 %v435
        %495 = vmatprep.subr.bf16.mxu0 0
        %496 = vmatpush1.bf16.msra.mxu0 0
        %497 = vmatprep.subr.bf16.mxu0 0
        %498 = vmatpush1.bf16.msra.mxu0 0
        %499 = vmatprep.subr.bf16.mxu0 0
        %500 = vmatpush1.bf16.msra.mxu0 0
        %501 = vmatprep.subr.bf16.mxu0 0
        %502 = vmatpush1.bf16.msra.mxu0 0
        %503 = vmatprep.subr.bf16.mxu0 0
        %504 = vmatpush1.bf16.msra.mxu0 0
        %505 = vmatprep.subr.bf16.mxu0 0
        %506 = vmatpush1.bf16.msra.mxu0 0
        %507 = vmatprep.subr.bf16.mxu0 0
        %508 = vmatpush1.bf16.msra.mxu0 0
        %509 = vmatprep.subr.bf16.mxu0 0
        %510 = vmatpush1.bf16.msra.mxu0 0
        %511 = vmatprep.subr.bf16.mxu0 0
        %512 = vmatpush1.bf16.msra.mxu0 0
        %513 = vmatprep.subr.bf16.mxu0 0
        %514 = vmatpush1.bf16.msra.mxu0 0
        %515 = vmatprep.subr.bf16.mxu0 0
        %516 = vmatpush1.bf16.msra.mxu0 0
        %517 = vmatprep.subr.bf16.mxu0 0
        %518 = vmatpush1.bf16.msra.mxu0 0
        %519 = vmatprep.subr.bf16.mxu0 0
        %520 = vmatpush1.bf16.msra.mxu0 0
        %521 = vmatprep.subr.bf16.mxu0 0
        %522 = vmatpush1.bf16.msra.mxu0 0
        %523 = vmatprep.subr.bf16.mxu0 0
        %524 = vmatpush1.bf16.msra.mxu0 0
        %525 = vmatprep.mubr.bf16.mxu0 0
        %526 = vmatmul.mubr.bf16.gmra.mrb[0].mxu0 %v491
        %v527 = vpop.f32.mrb[0].mxu0
        %v528 = vadd.f32 %v424, %v527
        %v529 = vpop.f32.mrb[0].mxu0
        %v530 = vpop.f32.mrb[0].mxu0
        %v531 = vadd.f32 %v424, %v530
        %v532 = vpop.f32.mrb[0].mxu0
        %533 = vdwg.mxu0
        %s534 = scalar_lea.vmem %s372, 16 [#allocation2]
        %v535 = vld [vmem:[%s534] sm:$0xf]
        %v536 = vld [vmem:[%s534 + $0x4] sm:$0xf]
        %v539 = vunpack.c.l.b16 %v535
        %v540 = vunpack.c.l.b16 %v536
        %v541 = vpack.c.b16 %v540, %v539
        %v543 = vsel %vm437, %v541, 0
        %545 = vmatprep.subr.bf16.mxu0 0
        %546 = vmatpush1.bf16.msra.mxu0 %v435
        %547 = vmatprep.subr.bf16.mxu0 0
        %548 = vmatpush1.bf16.msra.mxu0 0
        %549 = vmatprep.subr.bf16.mxu0 0
        %550 = vmatpush1.bf16.msra.mxu0 0
        %551 = vmatprep.subr.bf16.mxu0 0
        %552 = vmatpush1.bf16.msra.mxu0 0
        %553 = vmatprep.subr.bf16.mxu0 0
        %554 = vmatpush1.bf16.msra.mxu0 0
        %555 = vmatprep.subr.bf16.mxu0 0
        %556 = vmatpush1.bf16.msra.mxu0 0
        %557 = vmatprep.subr.bf16.mxu0 0
        %558 = vmatpush1.bf16.msra.mxu0 0
        %559 = vmatprep.subr.bf16.mxu0 0
        %560 = vmatpush1.bf16.msra.mxu0 0
        %561 = vmatprep.subr.bf16.mxu0 0
        %562 = vmatpush1.bf16.msra.mxu0 0
        %563 = vmatprep.subr.bf16.mxu0 0
        %564 = vmatpush1.bf16.msra.mxu0 0
        %565 = vmatprep.subr.bf16.mxu0 0
        %566 = vmatpush1.bf16.msra.mxu0 0
        %567 = vmatprep.subr.bf16.mxu0 0
        %568 = vmatpush1.bf16.msra.mxu0 0
        %569 = vmatprep.subr.bf16.mxu0 0
        %570 = vmatpush1.bf16.msra.mxu0 0
        %571 = vmatprep.subr.bf16.mxu0 0
        %572 = vmatpush1.bf16.msra.mxu0 0
        %573 = vmatprep.subr.bf16.mxu0 0
        %574 = vmatpush1.bf16.msra.mxu0 0
        %575 = vmatprep.subr.bf16.mxu0 0
        %576 = vmatpush1.bf16.msra.mxu0 0
        %577 = vmatprep.mubr.bf16.mxu0 0
        %578 = vmatmul.mubr.bf16.gmra.mrb[0].mxu0 %v543
        %v579 = vpop.f32.mrb[0].mxu0
        %v580 = vadd.f32 %v424, %v579
        %v581 = vpop.f32.mrb[0].mxu0
        %v582 = vpop.f32.mrb[0].mxu0
        %v583 = vadd.f32 %v424, %v582
        %v584 = vpop.f32.mrb[0].mxu0
        %585 = vdwg.mxu0
        %s586 = scalar_lea.vmem %s372, 24 [#allocation2]
        %v587 = vld [vmem:[%s586] sm:$0xf]
        %v588 = vld [vmem:[%s586 + $0x4] sm:$0xf]
        %v591 = vunpack.c.l.b16 %v587
        %v592 = vunpack.c.l.b16 %v588
        %v593 = vpack.c.b16 %v592, %v591
        %v595 = vsel %vm437, %v593, 0
        %597 = vmatprep.subr.bf16.mxu0 0
        %598 = vmatpush1.bf16.msra.mxu0 %v435
        %599 = vmatprep.subr.bf16.mxu0 0
        %600 = vmatpush1.bf16.msra.mxu0 0
        %601 = vmatprep.subr.bf16.mxu0 0
        %602 = vmatpush1.bf16.msra.mxu0 0
        %603 = vmatprep.subr.bf16.mxu0 0
        %604 = vmatpush1.bf16.msra.mxu0 0
        %605 = vmatprep.subr.bf16.mxu0 0
        %606 = vmatpush1.bf16.msra.mxu0 0
        %607 = vmatprep.subr.bf16.mxu0 0
        %608 = vmatpush1.bf16.msra.mxu0 0
        %609 = vmatprep.subr.bf16.mxu0 0
        %610 = vmatpush1.bf16.msra.mxu0 0
        %611 = vmatprep.subr.bf16.mxu0 0
        %612 = vmatpush1.bf16.msra.mxu0 0
        %613 = vmatprep.subr.bf16.mxu0 0
        %614 = vmatpush1.bf16.msra.mxu0 0
        %615 = vmatprep.subr.bf16.mxu0 0
        %616 = vmatpush1.bf16.msra.mxu0 0
        %617 = vmatprep.subr.bf16.mxu0 0
        %618 = vmatpush1.bf16.msra.mxu0 0
        %619 = vmatprep.subr.bf16.mxu0 0
        %620 = vmatpush1.bf16.msra.mxu0 0
        %621 = vmatprep.subr.bf16.mxu0 0
        %622 = vmatpush1.bf16.msra.mxu0 0
        %623 = vmatprep.subr.bf16.mxu0 0
        %624 = vmatpush1.bf16.msra.mxu0 0
        %625 = vmatprep.subr.bf16.mxu0 0
        %626 = vmatpush1.bf16.msra.mxu0 0
        %627 = vmatprep.subr.bf16.mxu0 0
        %628 = vmatpush1.bf16.msra.mxu0 0
        %629 = vmatprep.mubr.bf16.mxu0 0
        %630 = vmatmul.mubr.bf16.gmra.mrb[0].mxu0 %v595
        %v631 = vpop.f32.mrb[0].mxu0
        %v632 = vadd.f32 %v424, %v631
        %v633 = vpop.f32.mrb[0].mxu0
        %v634 = vpop.f32.mrb[0].mxu0
        %v635 = vadd.f32 %v424, %v634
        %v636 = vpop.f32.mrb[0].mxu0
        %637 = vdwg.mxu0
        %s638 = scalar_lea.vmem %s372, 32 [#allocation2]
        %v639 = vld [vmem:[%s638] sm:$0xf]
        %v640 = vld [vmem:[%s638 + $0x4] sm:$0xf]
        %v643 = vunpack.c.l.b16 %v639
        %v644 = vunpack.c.l.b16 %v640
        %v645 = vpack.c.b16 %v644, %v643
        %v647 = vsel %vm437, %v645, 0
        %649 = vmatprep.subr.bf16.mxu0 0
        %650 = vmatpush1.bf16.msra.mxu0 %v435
        %651 = vmatprep.subr.bf16.mxu0 0
        %652 = vmatpush1.bf16.msra.mxu0 0
        %653 = vmatprep.subr.bf16.mxu0 0
        %654 = vmatpush1.bf16.msra.mxu0 0
        %655 = vmatprep.subr.bf16.mxu0 0
        %656 = vmatpush1.bf16.msra.mxu0 0
        %657 = vmatprep.subr.bf16.mxu0 0
        %658 = vmatpush1.bf16.msra.mxu0 0
        %659 = vmatprep.subr.bf16.mxu0 0
        %660 = vmatpush1.bf16.msra.mxu0 0
        %661 = vmatprep.subr.bf16.mxu0 0
        %662 = vmatpush1.bf16.msra.mxu0 0
        %663 = vmatprep.subr.bf16.mxu0 0
        %664 = vmatpush1.bf16.msra.mxu0 0
        %665 = vmatprep.subr.bf16.mxu0 0
        %666 = vmatpush1.bf16.msra.mxu0 0
        %667 = vmatprep.subr.bf16.mxu0 0
        %668 = vmatpush1.bf16.msra.mxu0 0
        %669 = vmatprep.subr.bf16.mxu0 0
        %670 = vmatpush1.bf16.msra.mxu0 0
        %671 = vmatprep.subr.bf16.mxu0 0
        %672 = vmatpush1.bf16.msra.mxu0 0
        %673 = vmatprep.subr.bf16.mxu0 0
        %674 = vmatpush1.bf16.msra.mxu0 0
        %675 = vmatprep.subr.bf16.mxu0 0
        %676 = vmatpush1.bf16.msra.mxu0 0
        %677 = vmatprep.subr.bf16.mxu0 0
        %678 = vmatpush1.bf16.msra.mxu0 0
        %679 = vmatprep.subr.bf16.mxu0 0
        %680 = vmatpush1.bf16.msra.mxu0 0
        %681 = vmatprep.mubr.bf16.mxu0 0
        %682 = vmatmul.mubr.bf16.gmra.mrb[0].mxu0 %v647
        %v683 = vpop.f32.mrb[0].mxu0
        %v684 = vadd.f32 %v424, %v683
        %v685 = vpop.f32.mrb[0].mxu0
        %v686 = vpop.f32.mrb[0].mxu0
        %v687 = vadd.f32 %v424, %v686
        %v688 = vpop.f32.mrb[0].mxu0
        %689 = vdwg.mxu0
        %s690 = scalar_lea.vmem %s372, 40 [#allocation2]
        %v691 = vld [vmem:[%s690] sm:$0xf]
        %v692 = vld [vmem:[%s690 + $0x4] sm:$0xf]
        %v695 = vunpack.c.l.b16 %v691
        %v696 = vunpack.c.l.b16 %v692
        %v697 = vpack.c.b16 %v696, %v695
        %v699 = vsel %vm437, %v697, 0
        %701 = vmatprep.subr.bf16.mxu0 0
        %702 = vmatpush1.bf16.msra.mxu0 %v435
        %703 = vmatprep.subr.bf16.mxu0 0
        %704 = vmatpush1.bf16.msra.mxu0 0
        %705 = vmatprep.subr.bf16.mxu0 0
        %706 = vmatpush1.bf16.msra.mxu0 0
        %707 = vmatprep.subr.bf16.mxu0 0
        %708 = vmatpush1.bf16.msra.mxu0 0
        %709 = vmatprep.subr.bf16.mxu0 0
        %710 = vmatpush1.bf16.msra.mxu0 0
        %711 = vmatprep.subr.bf16.mxu0 0
        %712 = vmatpush1.bf16.msra.mxu0 0
        %713 = vmatprep.subr.bf16.mxu0 0
        %714 = vmatpush1.bf16.msra.mxu0 0
        %715 = vmatprep.subr.bf16.mxu0 0
        %716 = vmatpush1.bf16.msra.mxu0 0
        %717 = vmatprep.subr.bf16.mxu0 0
        %718 = vmatpush1.bf16.msra.mxu0 0
        %719 = vmatprep.subr.bf16.mxu0 0
        %720 = vmatpush1.bf16.msra.mxu0 0
        %721 = vmatprep.subr.bf16.mxu0 0
        %722 = vmatpush1.bf16.msra.mxu0 0
        %723 = vmatprep.subr.bf16.mxu0 0
        %724 = vmatpush1.bf16.msra.mxu0 0
        %725 = vmatprep.subr.bf16.mxu0 0
        %726 = vmatpush1.bf16.msra.mxu0 0
        %727 = vmatprep.subr.bf16.mxu0 0
        %728 = vmatpush1.bf16.msra.mxu0 0
        %729 = vmatprep.subr.bf16.mxu0 0
        %730 = vmatpush1.bf16.msra.mxu0 0
        %731 = vmatprep.subr.bf16.mxu0 0
        %732 = vmatpush1.bf16.msra.mxu0 0
        %733 = vmatprep.mubr.bf16.mxu0 0
        %734 = vmatmul.mubr.bf16.gmra.mrb[0].mxu0 %v699
        %v735 = vpop.f32.mrb[0].mxu0
        %v736 = vadd.f32 %v424, %v735
        %v737 = vpop.f32.mrb[0].mxu0
        %v738 = vpop.f32.mrb[0].mxu0
        %v739 = vadd.f32 %v424, %v738
        %v740 = vpop.f32.mrb[0].mxu0
        %741 = vdwg.mxu0
        %s742 = scalar_lea.vmem %s372, 48 [#allocation2]
        %v743 = vld [vmem:[%s742] sm:$0xf]
        %v744 = vld [vmem:[%s742 + $0x4] sm:$0xf]
        %v747 = vunpack.c.l.b16 %v743
        %v748 = vunpack.c.l.b16 %v744
        %v749 = vpack.c.b16 %v748, %v747
        %v751 = vsel %vm437, %v749, 0
        %753 = vmatprep.subr.bf16.mxu0 0
        %754 = vmatpush1.bf16.msra.mxu0 %v435
        %755 = vmatprep.subr.bf16.mxu0 0
        %756 = vmatpush1.bf16.msra.mxu0 0
        %757 = vmatprep.subr.bf16.mxu0 0
        %758 = vmatpush1.bf16.msra.mxu0 0
        %759 = vmatprep.subr.bf16.mxu0 0
        %760 = vmatpush1.bf16.msra.mxu0 0
        %761 = vmatprep.subr.bf16.mxu0 0
        %762 = vmatpush1.bf16.msra.mxu0 0
        %763 = vmatprep.subr.bf16.mxu0 0
        %764 = vmatpush1.bf16.msra.mxu0 0
        %765 = vmatprep.subr.bf16.mxu0 0
        %766 = vmatpush1.bf16.msra.mxu0 0
        %767 = vmatprep.subr.bf16.mxu0 0
        %768 = vmatpush1.bf16.msra.mxu0 0
        %769 = vmatprep.subr.bf16.mxu0 0
        %770 = vmatpush1.bf16.msra.mxu0 0
        %771 = vmatprep.subr.bf16.mxu0 0
        %772 = vmatpush1.bf16.msra.mxu0 0
        %773 = vmatprep.subr.bf16.mxu0 0
        %774 = vmatpush1.bf16.msra.mxu0 0
        %775 = vmatprep.subr.bf16.mxu0 0
        %776 = vmatpush1.bf16.msra.mxu0 0
        %777 = vmatprep.subr.bf16.mxu0 0
        %778 = vmatpush1.bf16.msra.mxu0 0
        %779 = vmatprep.subr.bf16.mxu0 0
        %780 = vmatpush1.bf16.msra.mxu0 0
        %781 = vmatprep.subr.bf16.mxu0 0
        %782 = vmatpush1.bf16.msra.mxu0 0
        %783 = vmatprep.subr.bf16.mxu0 0
        %784 = vmatpush1.bf16.msra.mxu0 0
        %785 = vmatprep.mubr.bf16.mxu0 0
        %786 = vmatmul.mubr.bf16.gmra.mrb[0].mxu0 %v751
        %v787 = vpop.f32.mrb[0].mxu0
        %v788 = vadd.f32 %v424, %v787
        %v789 = vpop.f32.mrb[0].mxu0
        %v790 = vpop.f32.mrb[0].mxu0
        %v791 = vadd.f32 %v424, %v790
        %v792 = vpop.f32.mrb[0].mxu0
        %793 = vdwg.mxu0
        %v795 = vlaneseq
        %v796 = vshrl.u32 %v795, 7
        %v797 = vsub.s32 0, %v796
        %v798 = vrot.slane %v416, %v797
        %v800 = vmul.f32 %v798, %v424
        %vm801 = vcmp.gt.f32.partialorder %v800, 1.0
        %v802 = vsel %vm801, 1.0, 0.0
        %vm803 = vcmask 261120
        %v804 = vsel %vm803, %v802, 0.0
        %vm805 = vcmask 277504
        %v806 = vsel %vm805, %v804, 0.0
        %807 = vst [vmem:[%s401] sm:$0xff] %v806
        %808 = vst [vmem:[%s401 + $0x8] sm:$0xff] %v806
        %v809 = vpack.c.bf16 %v802, %v802
        %v814 = vunpack.c.l.b16 %v407
        %v815 = vunpack.c.l.b16 %v408
        %v816 = vunpack.c.l.b16 %v409
        %v817 = vunpack.c.l.b16 %v410
        %v818 = vpack.c.b16 %v815, %v814
        %v819 = vpack.c.b16 %v817, %v816
        %v823 = vsel %vm803, %v809, 0
        %825 = vmatprep.subr.bf16.mxu0 0
        %826 = vmatpush1.bf16.msra.mxu0 %v818
        %827 = vmatprep.subr.bf16.mxu0 0
        %828 = vmatpush1.bf16.msra.mxu0 %v819
        %829 = vmatprep.subr.bf16.mxu0 0
        %830 = vmatpush1.bf16.msra.mxu0 0
        %831 = vmatprep.subr.bf16.mxu0 0
        %832 = vmatpush1.bf16.msra.mxu0 0
        %833 = vmatprep.subr.bf16.mxu0 0
        %834 = vmatpush1.bf16.msra.mxu0 0
        %835 = vmatprep.subr.bf16.mxu0 0
        %836 = vmatpush1.bf16.msra.mxu0 0
        %837 = vmatprep.subr.bf16.mxu0 0
        %838 = vmatpush1.bf16.msra.mxu0 0
        %839 = vmatprep.subr.bf16.mxu0 0
        %840 = vmatpush1.bf16.msra.mxu0 0
        %841 = vmatprep.subr.bf16.mxu0 0
        %842 = vmatpush1.bf16.msra.mxu0 0
        %843 = vmatprep.subr.bf16.mxu0 0
        %844 = vmatpush1.bf16.msra.mxu0 0
        %845 = vmatprep.subr.bf16.mxu0 0
        %846 = vmatpush1.bf16.msra.mxu0 0
        %847 = vmatprep.subr.bf16.mxu0 0
        %848 = vmatpush1.bf16.msra.mxu0 0
        %849 = vmatprep.subr.bf16.mxu0 0
        %850 = vmatpush1.bf16.msra.mxu0 0
        %851 = vmatprep.subr.bf16.mxu0 0
        %852 = vmatpush1.bf16.msra.mxu0 0
        %853 = vmatprep.subr.bf16.mxu0 0
        %854 = vmatpush1.bf16.msra.mxu0 0
        %855 = vmatprep.subr.bf16.mxu0 0
        %856 = vmatpush1.bf16.msra.mxu0 0
        %857 = vmatprep.mubr.bf16.mxu0 0
        %858 = vmatmul.mubr.bf16.gmra.mrb[0].mxu0 %v823
        %v859 = vpop.f32.mrb[0].mxu0
        %v860 = vadd.f32 0.0, %v859
        %v861 = vpop.f32.mrb[0].mxu0
        %v862 = vpop.f32.mrb[0].mxu0
        %v863 = vadd.f32 0.0, %v862
        %v864 = vpop.f32.mrb[0].mxu0
        %865 = vdwg.mxu0
        %v867 = vlaneseq
        %v868 = vshrl.u32 %v867, 7
        %v869 = vsub.s32 0, %v868
        %v870 = vrot.slane %v412, %v869
        %v872 = vmul.f32 %v870, %v424
        %v873 = vadd.f32 %v872, %v476
        %v874 = vadd.f32 %v872, %v479
        %v875 = vadd.f32 %v873, %v860
        %v876 = vadd.f32 %v874, %v863
        %v878 = vlaneseq
        %v879 = vshrl.u32 %v878, 7
        %v880 = vsub.s32 0, %v879
        %v881 = vrot.slane %v413, %v880
        %v883 = vmul.f32 %v881, %v800
        %v884 = vmul.f32 %v798, %v875
        %v885 = vmul.f32 %v798, %v876
        %v886 = vadd.f32 %v883, %v884
        %v887 = vadd.f32 %v883, %v885
        %v888 = vsub.f32 1.0, %v802
        %v889 = vmul.f32 %v886, %v888
        %v890 = vmul.f32 %v887, %v888
        %vm891 = vcmp.gt.f32.partialorder %v889, 1.0
        %vm892 = vcmp.gt.f32.partialorder %v890, 1.0
        %v893 = vsel %vm891, 1.0, 0.0
        %v894 = vsel %vm892, 1.0, 0.0
        %v896 = vlaneseq
        %v897 = vshrl.u32 %v896, 7
        %v898 = vsub.s32 0, %v897
        %v899 = vrot.slane %v414, %v898
        %v901 = vmul.f32 %v899, 0.0
        %904 = vrot.lane.b32.xlu0 %v860, 96
        %v905 = vpop.permute.xlu0 %904
        %906 = vrot.lane.b32.xlu0 %v863, 96
        %v907 = vpop.permute.xlu0 %906
        %v910 = vadd.f32 %v901, %v905
        %v911 = vadd.f32 %v901, %v907
        %v913 = vlaneseq
        %v914 = vshrl.u32 %v913, 7
        %v915 = vsub.s32 0, %v914
        %v916 = vrot.slane %v415, %v915
        %v918 = vmul.f32 %v916, 0.0
        %v920 = vlaneseq
        %v921 = vshrl.u32 %v920, 7
        %v922 = vsub.s32 0, %v921
        %v923 = vrot.slane %v417, %v922
        %v925 = vmul.f32 %v923, %v910
        %v926 = vmul.f32 %v923, %v911
        %v927 = vadd.f32 %v918, %v925
        %v928 = vadd.f32 %v918, %v926
        %931 = vrot.lane.b32.xlu0 %v927, 32
        %v932 = vpop.permute.xlu0 %931
        %933 = vrot.lane.b32.xlu0 %v928, 32
        %v934 = vpop.permute.xlu0 %933
        %v937 = vsel %vm803, %v893, %v932
        %v938 = vsel %vm803, %v894, %v934
        %v939 = vsel %vm805, %v937, 0.0
        %v940 = vsel %vm805, %v938, 0.0
        %s941 = scalar_lea.vmem %s401, 16 [#allocation3]
        %942 = vst [vmem:[%s941] sm:$0xff] %v939
        %943 = vst [vmem:[%s941 + $0x8] sm:$0xff] %v940
        %v944 = vpack.c.bf16 %v894, %v893
        %v946 = vsel %vm803, %v944, 0
        %948 = vmatprep.subr.bf16.mxu0 0
        %949 = vmatpush1.bf16.msra.mxu0 %v818
        %950 = vmatprep.subr.bf16.mxu0 0
        %951 = vmatpush1.bf16.msra.mxu0 %v819
        %952 = vmatprep.subr.bf16.mxu0 0
        %953 = vmatpush1.bf16.msra.mxu0 0
        %954 = vmatprep.subr.bf16.mxu0 0
        %955 = vmatpush1.bf16.msra.mxu0 0
        %956 = vmatprep.subr.bf16.mxu0 0
        %957 = vmatpush1.bf16.msra.mxu0 0
        %958 = vmatprep.subr.bf16.mxu0 0
        %959 = vmatpush1.bf16.msra.mxu0 0
        %960 = vmatprep.subr.bf16.mxu0 0
        %961 = vmatpush1.bf16.msra.mxu0 0
        %962 = vmatprep.subr.bf16.mxu0 0
        %963 = vmatpush1.bf16.msra.mxu0 0
        %964 = vmatprep.subr.bf16.mxu0 0
        %965 = vmatpush1.bf16.msra.mxu0 0
        %966 = vmatprep.subr.bf16.mxu0 0
        %967 = vmatpush1.bf16.msra.mxu0 0
        %968 = vmatprep.subr.bf16.mxu0 0
        %969 = vmatpush1.bf16.msra.mxu0 0
        %970 = vmatprep.subr.bf16.mxu0 0
        %971 = vmatpush1.bf16.msra.mxu0 0
        %972 = vmatprep.subr.bf16.mxu0 0
        %973 = vmatpush1.bf16.msra.mxu0 0
        %974 = vmatprep.subr.bf16.mxu0 0
        %975 = vmatpush1.bf16.msra.mxu0 0
        %976 = vmatprep.subr.bf16.mxu0 0
        %977 = vmatpush1.bf16.msra.mxu0 0
        %978 = vmatprep.subr.bf16.mxu0 0
        %979 = vmatpush1.bf16.msra.mxu0 0
        %980 = vmatprep.mubr.bf16.mxu0 0
        %981 = vmatmul.mubr.bf16.gmra.mrb[0].mxu0 %v946
        %v982 = vpop.f32.mrb[0].mxu0
        %v983 = vadd.f32 0.0, %v982
        %v984 = vpop.f32.mrb[0].mxu0
        %v985 = vpop.f32.mrb[0].mxu0
        %v986 = vadd.f32 0.0, %v985
        %v987 = vpop.f32.mrb[0].mxu0
        %988 = vdwg.mxu0
        %v989 = vmul.f32 %v870, %v875
        %v990 = vmul.f32 %v870, %v876
        %v991 = vadd.f32 %v989, %v528
        %v992 = vadd.f32 %v990, %v531
        %v993 = vadd.f32 %v991, %v983
        %v994 = vadd.f32 %v992, %v986
        %v995 = vmul.f32 %v881, %v889
        %v996 = vmul.f32 %v881, %v890
        %v997 = vmul.f32 %v798, %v993
        %v998 = vmul.f32 %v798, %v994
        %v999 = vadd.f32 %v995, %v997
        %v1000 = vadd.f32 %v996, %v998
        %v1001 = vsub.f32 1.0, %v893
        %v1002 = vsub.f32 1.0, %v894
        %v1003 = vmul.f32 %v999, %v1001
        %v1004 = vmul.f32 %v1000, %v1002
        %vm1005 = vcmp.gt.f32.partialorder %v1003, 1.0
        %vm1006 = vcmp.gt.f32.partialorder %v1004, 1.0
        %v1007 = vsel %vm1005, 1.0, 0.0
        %v1008 = vsel %vm1006, 1.0, 0.0
        %v1009 = vmul.f32 %v899, %v910
        %v1010 = vmul.f32 %v899, %v911
        %1013 = vrot.lane.b32.xlu0 %v983, 96
        %v1014 = vpop.permute.xlu0 %1013
        %1015 = vrot.lane.b32.xlu0 %v986, 96
        %v1016 = vpop.permute.xlu0 %1015
        %v1019 = vadd.f32 %v1009, %v1014
        %v1020 = vadd.f32 %v1010, %v1016
        %v1021 = vmul.f32 %v916, %v927
        %v1022 = vmul.f32 %v916, %v928
        %v1023 = vmul.f32 %v923, %v1019
        %v1024 = vmul.f32 %v923, %v1020
        %v1025 = vadd.f32 %v1021, %v1023
        %v1026 = vadd.f32 %v1022, %v1024
        %1029 = vrot.lane.b32.xlu0 %v1025, 32
        %v1030 = vpop.permute.xlu0 %1029
        %1031 = vrot.lane.b32.xlu0 %v1026, 32
        %v1032 = vpop.permute.xlu0 %1031
        %v1035 = vsel %vm803, %v1007, %v1030
        %v1036 = vsel %vm803, %v1008, %v1032
        %v1037 = vsel %vm805, %v1035, 0.0
        %v1038 = vsel %vm805, %v1036, 0.0
        %s1039 = scalar_lea.vmem %s401, 32 [#allocation3]
        %1040 = vst [vmem:[%s1039] sm:$0xff] %v1037
        %1041 = vst [vmem:[%s1039 + $0x8] sm:$0xff] %v1038
        %v1042 = vpack.c.bf16 %v1008, %v1007
        %v1044 = vsel %vm803, %v1042, 0
        %1046 = vmatprep.subr.bf16.mxu0 0
        %1047 = vmatpush1.bf16.msra.mxu0 %v818
        %1048 = vmatprep.subr.bf16.mxu0 0
        %1049 = vmatpush1.bf16.msra.mxu0 %v819
        %1050 = vmatprep.subr.bf16.mxu0 0
        %1051 = vmatpush1.bf16.msra.mxu0 0
        %1052 = vmatprep.subr.bf16.mxu0 0
        %1053 = vmatpush1.bf16.msra.mxu0 0
        %1054 = vmatprep.subr.bf16.mxu0 0
        %1055 = vmatpush1.bf16.msra.mxu0 0
        %1056 = vmatprep.subr.bf16.mxu0 0
        %1057 = vmatpush1.bf16.msra.mxu0 0
        %1058 = vmatprep.subr.bf16.mxu0 0
        %1059 = vmatpush1.bf16.msra.mxu0 0
        %1060 = vmatprep.subr.bf16.mxu0 0
        %1061 = vmatpush1.bf16.msra.mxu0 0
        %1062 = vmatprep.subr.bf16.mxu0 0
        %1063 = vmatpush1.bf16.msra.mxu0 0
        %1064 = vmatprep.subr.bf16.mxu0 0
        %1065 = vmatpush1.bf16.msra.mxu0 0
        %1066 = vmatprep.subr.bf16.mxu0 0
        %1067 = vmatpush1.bf16.msra.mxu0 0
        %1068 = vmatprep.subr.bf16.mxu0 0
        %1069 = vmatpush1.bf16.msra.mxu0 0
        %1070 = vmatprep.subr.bf16.mxu0 0
        %1071 = vmatpush1.bf16.msra.mxu0 0
        %1072 = vmatprep.subr.bf16.mxu0 0
        %1073 = vmatpush1.bf16.msra.mxu0 0
        %1074 = vmatprep.subr.bf16.mxu0 0
        %1075 = vmatpush1.bf16.msra.mxu0 0
        %1076 = vmatprep.subr.bf16.mxu0 0
        %1077 = vmatpush1.bf16.msra.mxu0 0
        %1078 = vmatprep.mubr.bf16.mxu0 0
        %1079 = vmatmul.mubr.bf16.gmra.mrb[0].mxu0 %v1044
        %v1080 = vpop.f32.mrb[0].mxu0
        %v1081 = vadd.f32 0.0, %v1080
        %v1082 = vpop.f32.mrb[0].mxu0
        %v1083 = vpop.f32.mrb[0].mxu0
        %v1084 = vadd.f32 0.0, %v1083
        %v1085 = vpop.f32.mrb[0].mxu0
        %1086 = vdwg.mxu0
        %v1087 = vmul.f32 %v870, %v993
        %v1088 = vmul.f32 %v870, %v994
        %v1089 = vadd.f32 %v1087, %v580
        %v1090 = vadd.f32 %v1088, %v583
        %v1091 = vadd.f32 %v1089, %v1081
        %v1092 = vadd.f32 %v1090, %v1084
        %v1093 = vmul.f32 %v881, %v1003
        %v1094 = vmul.f32 %v881, %v1004
        %v1095 = vmul.f32 %v798, %v1091
        %v1096 = vmul.f32 %v798, %v1092
        %v1097 = vadd.f32 %v1093, %v1095
        %v1098 = vadd.f32 %v1094, %v1096
        %v1099 = vsub.f32 1.0, %v1007
        %v1100 = vsub.f32 1.0, %v1008
        %v1101 = vmul.f32 %v1097, %v1099
        %v1102 = vmul.f32 %v1098, %v1100
        %vm1103 = vcmp.gt.f32.partialorder %v1101, 1.0
        %vm1104 = vcmp.gt.f32.partialorder %v1102, 1.0
        %v1105 = vsel %vm1103, 1.0, 0.0
        %v1106 = vsel %vm1104, 1.0, 0.0
        %v1107 = vmul.f32 %v899, %v1019
        %v1108 = vmul.f32 %v899, %v1020
        %1111 = vrot.lane.b32.xlu0 %v1081, 96
        %v1112 = vpop.permute.xlu0 %1111
        %1113 = vrot.lane.b32.xlu0 %v1084, 96
        %v1114 = vpop.permute.xlu0 %1113
        %v1117 = vadd.f32 %v1107, %v1112
        %v1118 = vadd.f32 %v1108, %v1114
        %v1119 = vmul.f32 %v916, %v1025
        %v1120 = vmul.f32 %v916, %v1026
        %v1121 = vmul.f32 %v923, %v1117
        %v1122 = vmul.f32 %v923, %v1118
        %v1123 = vadd.f32 %v1119, %v1121
        %v1124 = vadd.f32 %v1120, %v1122
        %1127 = vrot.lane.b32.xlu0 %v1123, 32
        %v1128 = vpop.permute.xlu0 %1127
        %1129 = vrot.lane.b32.xlu0 %v1124, 32
        %v1130 = vpop.permute.xlu0 %1129
        %v1133 = vsel %vm803, %v1105, %v1128
        %v1134 = vsel %vm803, %v1106, %v1130
        %v1135 = vsel %vm805, %v1133, 0.0
        %v1136 = vsel %vm805, %v1134, 0.0
        %s1137 = scalar_lea.vmem %s401, 48 [#allocation3]
        %1138 = vst [vmem:[%s1137] sm:$0xff] %v1135
        %1139 = vst [vmem:[%s1137 + $0x8] sm:$0xff] %v1136
        %v1140 = vpack.c.bf16 %v1106, %v1105
        %v1142 = vsel %vm803, %v1140, 0
        %1144 = vmatprep.subr.bf16.mxu0 0
        %1145 = vmatpush1.bf16.msra.mxu0 %v818
        %1146 = vmatprep.subr.bf16.mxu0 0
        %1147 = vmatpush1.bf16.msra.mxu0 %v819
        %1148 = vmatprep.subr.bf16.mxu0 0
        %1149 = vmatpush1.bf16.msra.mxu0 0
        %1150 = vmatprep.subr.bf16.mxu0 0
        %1151 = vmatpush1.bf16.msra.mxu0 0
        %1152 = vmatprep.subr.bf16.mxu0 0
        %1153 = vmatpush1.bf16.msra.mxu0 0
        %1154 = vmatprep.subr.bf16.mxu0 0
        %1155 = vmatpush1.bf16.msra.mxu0 0
        %1156 = vmatprep.subr.bf16.mxu0 0
        %1157 = vmatpush1.bf16.msra.mxu0 0
        %1158 = vmatprep.subr.bf16.mxu0 0
        %1159 = vmatpush1.bf16.msra.mxu0 0
        %1160 = vmatprep.subr.bf16.mxu0 0
        %1161 = vmatpush1.bf16.msra.mxu0 0
        %1162 = vmatprep.subr.bf16.mxu0 0
        %1163 = vmatpush1.bf16.msra.mxu0 0
        %1164 = vmatprep.subr.bf16.mxu0 0
        %1165 = vmatpush1.bf16.msra.mxu0 0
        %1166 = vmatprep.subr.bf16.mxu0 0
        %1167 = vmatpush1.bf16.msra.mxu0 0
        %1168 = vmatprep.subr.bf16.mxu0 0
        %1169 = vmatpush1.bf16.msra.mxu0 0
        %1170 = vmatprep.subr.bf16.mxu0 0
        %1171 = vmatpush1.bf16.msra.mxu0 0
        %1172 = vmatprep.subr.bf16.mxu0 0
        %1173 = vmatpush1.bf16.msra.mxu0 0
        %1174 = vmatprep.subr.bf16.mxu0 0
        %1175 = vmatpush1.bf16.msra.mxu0 0
        %1176 = vmatprep.mubr.bf16.mxu0 0
        %1177 = vmatmul.mubr.bf16.gmra.mrb[0].mxu0 %v1142
        %v1178 = vpop.f32.mrb[0].mxu0
        %v1179 = vadd.f32 0.0, %v1178
        %v1180 = vpop.f32.mrb[0].mxu0
        %v1181 = vpop.f32.mrb[0].mxu0
        %v1182 = vadd.f32 0.0, %v1181
        %v1183 = vpop.f32.mrb[0].mxu0
        %1184 = vdwg.mxu0
        %v1185 = vmul.f32 %v870, %v1091
        %v1186 = vmul.f32 %v870, %v1092
        %v1187 = vadd.f32 %v1185, %v632
        %v1188 = vadd.f32 %v1186, %v635
        %v1189 = vadd.f32 %v1187, %v1179
        %v1190 = vadd.f32 %v1188, %v1182
        %v1191 = vmul.f32 %v881, %v1101
        %v1192 = vmul.f32 %v881, %v1102
        %v1193 = vmul.f32 %v798, %v1189
        %v1194 = vmul.f32 %v798, %v1190
        %v1195 = vadd.f32 %v1191, %v1193
        %v1196 = vadd.f32 %v1192, %v1194
        %v1197 = vsub.f32 1.0, %v1105
        %v1198 = vsub.f32 1.0, %v1106
        %v1199 = vmul.f32 %v1195, %v1197
        %v1200 = vmul.f32 %v1196, %v1198
        %vm1201 = vcmp.gt.f32.partialorder %v1199, 1.0
        %vm1202 = vcmp.gt.f32.partialorder %v1200, 1.0
        %v1203 = vsel %vm1201, 1.0, 0.0
        %v1204 = vsel %vm1202, 1.0, 0.0
        %v1205 = vmul.f32 %v899, %v1117
        %v1206 = vmul.f32 %v899, %v1118
        %1209 = vrot.lane.b32.xlu0 %v1179, 96
        %v1210 = vpop.permute.xlu0 %1209
        %1211 = vrot.lane.b32.xlu0 %v1182, 96
        %v1212 = vpop.permute.xlu0 %1211
        %v1215 = vadd.f32 %v1205, %v1210
        %v1216 = vadd.f32 %v1206, %v1212
        %v1217 = vmul.f32 %v916, %v1123
        %v1218 = vmul.f32 %v916, %v1124
        %v1219 = vmul.f32 %v923, %v1215
        %v1220 = vmul.f32 %v923, %v1216
        %v1221 = vadd.f32 %v1217, %v1219
        %v1222 = vadd.f32 %v1218, %v1220
        %1225 = vrot.lane.b32.xlu0 %v1221, 32
        %v1226 = vpop.permute.xlu0 %1225
        %1227 = vrot.lane.b32.xlu0 %v1222, 32
        %v1228 = vpop.permute.xlu0 %1227
        %v1231 = vsel %vm803, %v1203, %v1226
        %v1232 = vsel %vm803, %v1204, %v1228
        %v1233 = vsel %vm805, %v1231, 0.0
        %v1234 = vsel %vm805, %v1232, 0.0
        %s1235 = scalar_lea.vmem %s401, 64 [#allocation3]
        %1236 = vst [vmem:[%s1235] sm:$0xff] %v1233
        %1237 = vst [vmem:[%s1235 + $0x8] sm:$0xff] %v1234
        %v1238 = vpack.c.bf16 %v1204, %v1203
        %v1240 = vsel %vm803, %v1238, 0
        %1242 = vmatprep.subr.bf16.mxu0 0
        %1243 = vmatpush1.bf16.msra.mxu0 %v818
        %1244 = vmatprep.subr.bf16.mxu0 0
        %1245 = vmatpush1.bf16.msra.mxu0 %v819
        %1246 = vmatprep.subr.bf16.mxu0 0
        %1247 = vmatpush1.bf16.msra.mxu0 0
        %1248 = vmatprep.subr.bf16.mxu0 0
        %1249 = vmatpush1.bf16.msra.mxu0 0
        %1250 = vmatprep.subr.bf16.mxu0 0
        %1251 = vmatpush1.bf16.msra.mxu0 0
        %1252 = vmatprep.subr.bf16.mxu0 0
        %1253 = vmatpush1.bf16.msra.mxu0 0
        %1254 = vmatprep.subr.bf16.mxu0 0
        %1255 = vmatpush1.bf16.msra.mxu0 0
        %1256 = vmatprep.subr.bf16.mxu0 0
        %1257 = vmatpush1.bf16.msra.mxu0 0
        %1258 = vmatprep.subr.bf16.mxu0 0
        %1259 = vmatpush1.bf16.msra.mxu0 0
        %1260 = vmatprep.subr.bf16.mxu0 0
        %1261 = vmatpush1.bf16.msra.mxu0 0
        %1262 = vmatprep.subr.bf16.mxu0 0
        %1263 = vmatpush1.bf16.msra.mxu0 0
        %1264 = vmatprep.subr.bf16.mxu0 0
        %1265 = vmatpush1.bf16.msra.mxu0 0
        %1266 = vmatprep.subr.bf16.mxu0 0
        %1267 = vmatpush1.bf16.msra.mxu0 0
        %1268 = vmatprep.subr.bf16.mxu0 0
        %1269 = vmatpush1.bf16.msra.mxu0 0
        %1270 = vmatprep.subr.bf16.mxu0 0
        %1271 = vmatpush1.bf16.msra.mxu0 0
        %1272 = vmatprep.subr.bf16.mxu0 0
        %1273 = vmatpush1.bf16.msra.mxu0 0
        %1274 = vmatprep.mubr.bf16.mxu0 0
        %1275 = vmatmul.mubr.bf16.gmra.mrb[0].mxu0 %v1240
        %v1276 = vpop.f32.mrb[0].mxu0
        %v1277 = vadd.f32 0.0, %v1276
        %v1278 = vpop.f32.mrb[0].mxu0
        %v1279 = vpop.f32.mrb[0].mxu0
        %v1280 = vadd.f32 0.0, %v1279
        %v1281 = vpop.f32.mrb[0].mxu0
        %1282 = vdwg.mxu0
        %v1283 = vmul.f32 %v870, %v1189
        %v1284 = vmul.f32 %v870, %v1190
        %v1285 = vadd.f32 %v1283, %v684
        %v1286 = vadd.f32 %v1284, %v687
        %v1287 = vadd.f32 %v1285, %v1277
        %v1288 = vadd.f32 %v1286, %v1280
        %v1289 = vmul.f32 %v881, %v1199
        %v1290 = vmul.f32 %v881, %v1200
        %v1291 = vmul.f32 %v798, %v1287
        %v1292 = vmul.f32 %v798, %v1288
        %v1293 = vadd.f32 %v1289, %v1291
        %v1294 = vadd.f32 %v1290, %v1292
        %v1295 = vsub.f32 1.0, %v1203
        %v1296 = vsub.f32 1.0, %v1204
        %v1297 = vmul.f32 %v1293, %v1295
        %v1298 = vmul.f32 %v1294, %v1296
        %vm1299 = vcmp.gt.f32.partialorder %v1297, 1.0
        %vm1300 = vcmp.gt.f32.partialorder %v1298, 1.0
        %v1301 = vsel %vm1299, 1.0, 0.0
        %v1302 = vsel %vm1300, 1.0, 0.0
        %v1303 = vmul.f32 %v899, %v1215
        %v1304 = vmul.f32 %v899, %v1216
        %1307 = vrot.lane.b32.xlu0 %v1277, 96
        %v1308 = vpop.permute.xlu0 %1307
        %1309 = vrot.lane.b32.xlu0 %v1280, 96
        %v1310 = vpop.permute.xlu0 %1309
        %v1313 = vadd.f32 %v1303, %v1308
        %v1314 = vadd.f32 %v1304, %v1310
        %v1315 = vmul.f32 %v916, %v1221
        %v1316 = vmul.f32 %v916, %v1222
        %v1317 = vmul.f32 %v923, %v1313
        %v1318 = vmul.f32 %v923, %v1314
        %v1319 = vadd.f32 %v1315, %v1317
        %v1320 = vadd.f32 %v1316, %v1318
        %1323 = vrot.lane.b32.xlu0 %v1319, 32
        %v1324 = vpop.permute.xlu0 %1323
        %1325 = vrot.lane.b32.xlu0 %v1320, 32
        %v1326 = vpop.permute.xlu0 %1325
        %v1329 = vsel %vm803, %v1301, %v1324
        %v1330 = vsel %vm803, %v1302, %v1326
        %v1331 = vsel %vm805, %v1329, 0.0
        %v1332 = vsel %vm805, %v1330, 0.0
        %s1333 = scalar_lea.vmem %s401, 80 [#allocation3]
        %1334 = vst [vmem:[%s1333] sm:$0xff] %v1331
        %1335 = vst [vmem:[%s1333 + $0x8] sm:$0xff] %v1332
        %v1336 = vpack.c.bf16 %v1302, %v1301
        %v1338 = vsel %vm803, %v1336, 0
        %1340 = vmatprep.subr.bf16.mxu0 0
        %1341 = vmatpush1.bf16.msra.mxu0 %v818
        %1342 = vmatprep.subr.bf16.mxu0 0
        %1343 = vmatpush1.bf16.msra.mxu0 %v819
        %1344 = vmatprep.subr.bf16.mxu0 0
        %1345 = vmatpush1.bf16.msra.mxu0 0
        %1346 = vmatprep.subr.bf16.mxu0 0
        %1347 = vmatpush1.bf16.msra.mxu0 0
        %1348 = vmatprep.subr.bf16.mxu0 0
        %1349 = vmatpush1.bf16.msra.mxu0 0
        %1350 = vmatprep.subr.bf16.mxu0 0
        %1351 = vmatpush1.bf16.msra.mxu0 0
        %1352 = vmatprep.subr.bf16.mxu0 0
        %1353 = vmatpush1.bf16.msra.mxu0 0
        %1354 = vmatprep.subr.bf16.mxu0 0
        %1355 = vmatpush1.bf16.msra.mxu0 0
        %1356 = vmatprep.subr.bf16.mxu0 0
        %1357 = vmatpush1.bf16.msra.mxu0 0
        %1358 = vmatprep.subr.bf16.mxu0 0
        %1359 = vmatpush1.bf16.msra.mxu0 0
        %1360 = vmatprep.subr.bf16.mxu0 0
        %1361 = vmatpush1.bf16.msra.mxu0 0
        %1362 = vmatprep.subr.bf16.mxu0 0
        %1363 = vmatpush1.bf16.msra.mxu0 0
        %1364 = vmatprep.subr.bf16.mxu0 0
        %1365 = vmatpush1.bf16.msra.mxu0 0
        %1366 = vmatprep.subr.bf16.mxu0 0
        %1367 = vmatpush1.bf16.msra.mxu0 0
        %1368 = vmatprep.subr.bf16.mxu0 0
        %1369 = vmatpush1.bf16.msra.mxu0 0
        %1370 = vmatprep.subr.bf16.mxu0 0
        %1371 = vmatpush1.bf16.msra.mxu0 0
        %1372 = vmatprep.mubr.bf16.mxu0 0
        %1373 = vmatmul.mubr.bf16.gmra.mrb[0].mxu0 %v1338
        %v1374 = vpop.f32.mrb[0].mxu0
        %v1375 = vadd.f32 0.0, %v1374
        %v1376 = vpop.f32.mrb[0].mxu0
        %v1377 = vpop.f32.mrb[0].mxu0
        %v1378 = vadd.f32 0.0, %v1377
        %v1379 = vpop.f32.mrb[0].mxu0
        %1380 = vdwg.mxu0
        %v1381 = vmul.f32 %v870, %v1287
        %v1382 = vmul.f32 %v870, %v1288
        %v1383 = vadd.f32 %v1381, %v736
        %v1384 = vadd.f32 %v1382, %v739
        %v1385 = vadd.f32 %v1383, %v1375
        %v1386 = vadd.f32 %v1384, %v1378
        %v1387 = vmul.f32 %v881, %v1297
        %v1388 = vmul.f32 %v881, %v1298
        %v1389 = vmul.f32 %v798, %v1385
        %v1390 = vmul.f32 %v798, %v1386
        %v1391 = vadd.f32 %v1387, %v1389
        %v1392 = vadd.f32 %v1388, %v1390
        %v1393 = vsub.f32 1.0, %v1301
        %v1394 = vsub.f32 1.0, %v1302
        %v1395 = vmul.f32 %v1391, %v1393
        %v1396 = vmul.f32 %v1392, %v1394
        %vm1397 = vcmp.gt.f32.partialorder %v1395, 1.0
        %vm1398 = vcmp.gt.f32.partialorder %v1396, 1.0
        %v1399 = vsel %vm1397, 1.0, 0.0
        %v1400 = vsel %vm1398, 1.0, 0.0
        %v1401 = vmul.f32 %v899, %v1313
        %v1402 = vmul.f32 %v899, %v1314
        %1405 = vrot.lane.b32.xlu0 %v1375, 96
        %v1406 = vpop.permute.xlu0 %1405
        %1407 = vrot.lane.b32.xlu0 %v1378, 96
        %v1408 = vpop.permute.xlu0 %1407
        %v1411 = vadd.f32 %v1401, %v1406
        %v1412 = vadd.f32 %v1402, %v1408
        %v1413 = vmul.f32 %v916, %v1319
        %v1414 = vmul.f32 %v916, %v1320
        %v1415 = vmul.f32 %v923, %v1411
        %v1416 = vmul.f32 %v923, %v1412
        %v1417 = vadd.f32 %v1413, %v1415
        %v1418 = vadd.f32 %v1414, %v1416
        %1421 = vrot.lane.b32.xlu0 %v1417, 32
        %v1422 = vpop.permute.xlu0 %1421
        %1423 = vrot.lane.b32.xlu0 %v1418, 32
        %v1424 = vpop.permute.xlu0 %1423
        %v1427 = vsel %vm803, %v1399, %v1422
        %v1428 = vsel %vm803, %v1400, %v1424
        %v1429 = vsel %vm805, %v1427, 0.0
        %v1430 = vsel %vm805, %v1428, 0.0
        %s1431 = scalar_lea.vmem %s401, 96 [#allocation3]
        %1432 = vst [vmem:[%s1431] sm:$0xff] %v1429
        %1433 = vst [vmem:[%s1431 + $0x8] sm:$0xff] %v1430
        %v1434 = vpack.c.bf16 %v1400, %v1399
        %v1436 = vsel %vm803, %v1434, 0
        %1438 = vmatprep.subr.bf16.mxu0 0
        %1439 = vmatpush1.bf16.msra.mxu0 %v818
        %1440 = vmatprep.subr.bf16.mxu0 0
        %1441 = vmatpush1.bf16.msra.mxu0 %v819
        %1442 = vmatprep.subr.bf16.mxu0 0
        %1443 = vmatpush1.bf16.msra.mxu0 0
        %1444 = vmatprep.subr.bf16.mxu0 0
        %1445 = vmatpush1.bf16.msra.mxu0 0
        %1446 = vmatprep.subr.bf16.mxu0 0
        %1447 = vmatpush1.bf16.msra.mxu0 0
        %1448 = vmatprep.subr.bf16.mxu0 0
        %1449 = vmatpush1.bf16.msra.mxu0 0
        %1450 = vmatprep.subr.bf16.mxu0 0
        %1451 = vmatpush1.bf16.msra.mxu0 0
        %1452 = vmatprep.subr.bf16.mxu0 0
        %1453 = vmatpush1.bf16.msra.mxu0 0
        %1454 = vmatprep.subr.bf16.mxu0 0
        %1455 = vmatpush1.bf16.msra.mxu0 0
        %1456 = vmatprep.subr.bf16.mxu0 0
        %1457 = vmatpush1.bf16.msra.mxu0 0
        %1458 = vmatprep.subr.bf16.mxu0 0
        %1459 = vmatpush1.bf16.msra.mxu0 0
        %1460 = vmatprep.subr.bf16.mxu0 0
        %1461 = vmatpush1.bf16.msra.mxu0 0
        %1462 = vmatprep.subr.bf16.mxu0 0
        %1463 = vmatpush1.bf16.msra.mxu0 0
        %1464 = vmatprep.subr.bf16.mxu0 0
        %1465 = vmatpush1.bf16.msra.mxu0 0
        %1466 = vmatprep.subr.bf16.mxu0 0
        %1467 = vmatpush1.bf16.msra.mxu0 0
        %1468 = vmatprep.subr.bf16.mxu0 0
        %1469 = vmatpush1.bf16.msra.mxu0 0
        %1470 = vmatprep.mubr.bf16.mxu0 0
        %1471 = vmatmul.mubr.bf16.gmra.mrb[0].mxu0 %v1436
        %v1472 = vpop.f32.mrb[0].mxu0
        %v1473 = vadd.f32 0.0, %v1472
        %v1474 = vpop.f32.mrb[0].mxu0
        %v1475 = vpop.f32.mrb[0].mxu0
        %v1476 = vadd.f32 0.0, %v1475
        %v1477 = vpop.f32.mrb[0].mxu0
        %1478 = vdwg.mxu0
        %v1479 = vmul.f32 %v870, %v1385
        %v1480 = vmul.f32 %v870, %v1386
        %v1481 = vadd.f32 %v1479, %v788
        %v1482 = vadd.f32 %v1480, %v791
        %v1483 = vadd.f32 %v1481, %v1473
        %v1484 = vadd.f32 %v1482, %v1476
        %v1485 = vmul.f32 %v881, %v1395
        %v1486 = vmul.f32 %v881, %v1396
        %v1487 = vmul.f32 %v798, %v1483
        %v1488 = vmul.f32 %v798, %v1484
        %v1489 = vadd.f32 %v1485, %v1487
        %v1490 = vadd.f32 %v1486, %v1488
        %v1491 = vsub.f32 1.0, %v1399
        %v1492 = vsub.f32 1.0, %v1400
        %v1493 = vmul.f32 %v1489, %v1491
        %v1494 = vmul.f32 %v1490, %v1492
        %vm1495 = vcmp.gt.f32.partialorder %v1493, 1.0
        %vm1496 = vcmp.gt.f32.partialorder %v1494, 1.0
        %v1497 = vsel %vm1495, 1.0, 0.0
        %v1498 = vsel %vm1496, 1.0, 0.0
        %v1499 = vmul.f32 %v899, %v1411
        %v1500 = vmul.f32 %v899, %v1412
        %1503 = vrot.lane.b32.xlu0 %v1473, 96
        %v1504 = vpop.permute.xlu0 %1503
        %1505 = vrot.lane.b32.xlu0 %v1476, 96
        %v1506 = vpop.permute.xlu0 %1505
        %v1509 = vadd.f32 %v1499, %v1504
        %v1510 = vadd.f32 %v1500, %v1506
        %v1511 = vmul.f32 %v916, %v1417
        %v1512 = vmul.f32 %v916, %v1418
        %v1513 = vmul.f32 %v923, %v1509
        %v1514 = vmul.f32 %v923, %v1510
        %v1515 = vadd.f32 %v1511, %v1513
        %v1516 = vadd.f32 %v1512, %v1514
        %1519 = vrot.lane.b32.xlu0 %v1515, 32
        %v1520 = vpop.permute.xlu0 %1519
        %1521 = vrot.lane.b32.xlu0 %v1516, 32
        %v1522 = vpop.permute.xlu0 %1521
        %v1525 = vsel %vm803, %v1497, %v1520
        %v1526 = vsel %vm803, %v1498, %v1522
        %v1527 = vsel %vm805, %v1525, 0.0
        %v1528 = vsel %vm805, %v1526, 0.0
        %s1529 = scalar_lea.vmem %s401, 112 [#allocation3]
        %1530 = vst [vmem:[%s1529] sm:$0xff] %v1527
        %1531 = vst [vmem:[%s1529 + $0x8] sm:$0xff] %v1528
        %s1532 = sand.u32 %s200, 1
        %s1533 = sand.u32 %s200, 1
        %s1534 = smul.addr %s1533, 128
        %s1535 = scalar_lea.vmem [#allocation3], %s1534
        // Predicated region
        $region94: #{tiny_rsnn_forward.1} parent=88 // pred_check
          %p1536 = pneg %p210
        $region95: #{tiny_rsnn_forward.1} parent=88 // pred_check_branch
          %1538 = sbr.rel (%p1536) target = $region97
        $region96: #{tiny_rsnn_forward.1} parent=88 // pred_region
          %s1539 = smul.u32 2, %s19
          %s1540 = smul.addr %s1539, 8
          %s1541 = scalar_lea.vmem %s8, %s1540
          // Predicated region
          $region98: #{tiny_rsnn_forward.1} parent=96 // pred_check
            _
          $region99: #{tiny_rsnn_forward.1} parent=96 // pred_check_branch
            %1543 = sbr.rel (0) target = $region101
          $region100: #{tiny_rsnn_forward.1} parent=96 // pred_region
            // Predicated region
            $region102: #{tiny_rsnn_forward.1} parent=100 // pred_check
              _
            $region103: #{tiny_rsnn_forward.1} parent=100 // pred_check_branch
              %1545 = sbr.rel (0) target = $region105
            $region104: #{tiny_rsnn_forward.1} parent=100 // pred_region
              // Predicated region
              $region117: #{tiny_rsnn_forward.1} parent=104 // pred_check
                _
              $region118: #{tiny_rsnn_forward.1} parent=104 // pred_check_branch
                %1590 = sbr.rel (0) target = $region120
              $region119: #{tiny_rsnn_forward.1} parent=104 // pred_region
                loop: start=0, step=1, limit=1
                $region121: #{tiny_rsnn_forward.1} parent=119 // loop_pre_header
                  _
                $region122: #{tiny_rsnn_forward.1} parent=119 // loop_header
                  %s1592 = sphi 0, %s1596
                  %p1593 = scmp.ge.s32.totalorder %s1592, 1
                  %s1597 = sphi %s1535, %s1535
                  %s1598 = sphi %s1541, %s1541
                $region123: #{tiny_rsnn_forward.1} parent=119 // loop_header_branch
                  %1595 = sbr.rel (%p1593) target = $region127
                $region124: #{tiny_rsnn_forward.1} parent=119 // loop_body
                  %v1599 = vld [vmem:[%s1597] sm:$0xff]
                  %1600 = vst [vmem:[%s1598] sm:$0xff] %v1599
                  %v1601 = vld [vmem:[%s1597 + $0x8] sm:$0xff]
                  %1602 = vst [vmem:[%s1598 + $0x8] sm:$0xff] %v1601
                  %v1603 = vld [vmem:[%s1597 + $0x10] sm:$0xff]
                  %1604 = vst [vmem:[%s1598 + $0x20] sm:$0xff] %v1603
                  %v1605 = vld [vmem:[%s1597 + $0x18] sm:$0xff]
                  %1606 = vst [vmem:[%s1598 + $0x28] sm:$0xff] %v1605
                  %v1607 = vld [vmem:[%s1597 + $0x20] sm:$0xff]
                  %1608 = vst [vmem:[%s1598 + $0x40] sm:$0xff] %v1607
                  %v1609 = vld [vmem:[%s1597 + $0x28] sm:$0xff]
                  %1610 = vst [vmem:[%s1598 + $0x48] sm:$0xff] %v1609
                  %v1611 = vld [vmem:[%s1597 + $0x30] sm:$0xff]
                  %1612 = vst [vmem:[%s1598 + $0x60] sm:$0xff] %v1611
                  %v1613 = vld [vmem:[%s1597 + $0x38] sm:$0xff]
                  %1614 = vst [vmem:[%s1598 + $0x68] sm:$0xff] %v1613
                  %v1615 = vld [vmem:[%s1597 + $0x40] sm:$0xff]
                  %1616 = vst [vmem:[%s1598 + $0x80] sm:$0xff] %v1615
                  %v1617 = vld [vmem:[%s1597 + $0x48] sm:$0xff]
                  %1618 = vst [vmem:[%s1598 + $0x88] sm:$0xff] %v1617
                  %v1619 = vld [vmem:[%s1597 + $0x50] sm:$0xff]
                  %1620 = vst [vmem:[%s1598 + $0xa0] sm:$0xff] %v1619
                  %v1621 = vld [vmem:[%s1597 + $0x58] sm:$0xff]
                  %1622 = vst [vmem:[%s1598 + $0xa8] sm:$0xff] %v1621
                  %v1623 = vld [vmem:[%s1597 + $0x60] sm:$0xff]
                  %1624 = vst [vmem:[%s1598 + $0xc0] sm:$0xff] %v1623
                  %v1625 = vld [vmem:[%s1597 + $0x68] sm:$0xff]
                  %1626 = vst [vmem:[%s1598 + $0xc8] sm:$0xff] %v1625
                  %v1627 = vld [vmem:[%s1597 + $0x70] sm:$0xff]
                  %1628 = vst [vmem:[%s1598 + $0xe0] sm:$0xff] %v1627
                  %v1629 = vld [vmem:[%s1597 + $0x78] sm:$0xff]
                  %1630 = vst [vmem:[%s1598 + $0xe8] sm:$0xff] %v1629
                $region125: #{tiny_rsnn_forward.1} parent=119 // loop_footer
                  %s1596 = sadd.s32 1, %s1592
                $region126: #{tiny_rsnn_forward.1} parent=119 // loop_footer_branch
                  %1591 = sbr.rel target = $region122
                $region127: #{tiny_rsnn_forward.1} parent=119 // loop_exit
                  _
              $region120: #{tiny_rsnn_forward.1} parent=104 // pred_fallthru
                _
              // Predicated region
              $region128: #{tiny_rsnn_forward.1} parent=104 // pred_check
                _
              $region129: #{tiny_rsnn_forward.1} parent=104 // pred_check_branch
                %1632 = sbr.rel target = $region131
              $region130: #{tiny_rsnn_forward.1} parent=104 // pred_region
                _
              $region131: #{tiny_rsnn_forward.1} parent=104 // pred_fallthru
                _
            $region105: #{tiny_rsnn_forward.1} parent=100 // pred_fallthru
              _
            // Predicated region
            $region106: #{tiny_rsnn_forward.1} parent=100 // pred_check
              _
            $region107: #{tiny_rsnn_forward.1} parent=100 // pred_check_branch
              %1547 = sbr.rel target = $region109
            $region108: #{tiny_rsnn_forward.1} parent=100 // pred_region
              loop: start=0, step=1, limit=1
              $region110: #{tiny_rsnn_forward.1} parent=108 // loop_pre_header
                _
              $region111: #{tiny_rsnn_forward.1} parent=108 // loop_header
                %s1550 = sphi 0, %s1554
                %p1551 = scmp.ge.s32.totalorder %s1550, 1
                %s1555 = sphi %s1535, %s1535
                %s1556 = sphi %s1541, %s1541
              $region112: #{tiny_rsnn_forward.1} parent=108 // loop_header_branch
                %1553 = sbr.rel (%p1551) target = $region116
              $region113: #{tiny_rsnn_forward.1} parent=108 // loop_body
                %v1557 = vld [vmem:[%s1555] sm:$0xff]
                %1558 = vst [vmem:[%s1556] sm:$0xff] %v1557
                %v1559 = vld [vmem:[%s1555 + $0x8] sm:$0xff]
                %1560 = vst [vmem:[%s1556 + $0x8] sm:$0xff] %v1559
                %v1561 = vld [vmem:[%s1555 + $0x10] sm:$0xff]
                %1562 = vst [vmem:[%s1556 + $0x20] sm:$0xff] %v1561
                %v1563 = vld [vmem:[%s1555 + $0x18] sm:$0xff]
                %1564 = vst [vmem:[%s1556 + $0x28] sm:$0xff] %v1563
                %v1565 = vld [vmem:[%s1555 + $0x20] sm:$0xff]
                %1566 = vst [vmem:[%s1556 + $0x40] sm:$0xff] %v1565
                %v1567 = vld [vmem:[%s1555 + $0x28] sm:$0xff]
                %1568 = vst [vmem:[%s1556 + $0x48] sm:$0xff] %v1567
                %v1569 = vld [vmem:[%s1555 + $0x30] sm:$0xff]
                %1570 = vst [vmem:[%s1556 + $0x60] sm:$0xff] %v1569
                %v1571 = vld [vmem:[%s1555 + $0x38] sm:$0xff]
                %1572 = vst [vmem:[%s1556 + $0x68] sm:$0xff] %v1571
                %v1573 = vld [vmem:[%s1555 + $0x40] sm:$0xff]
                %1574 = vst [vmem:[%s1556 + $0x80] sm:$0xff] %v1573
                %v1575 = vld [vmem:[%s1555 + $0x48] sm:$0xff]
                %1576 = vst [vmem:[%s1556 + $0x88] sm:$0xff] %v1575
                %v1577 = vld [vmem:[%s1555 + $0x50] sm:$0xff]
                %1578 = vst [vmem:[%s1556 + $0xa0] sm:$0xff] %v1577
                %v1579 = vld [vmem:[%s1555 + $0x58] sm:$0xff]
                %1580 = vst [vmem:[%s1556 + $0xa8] sm:$0xff] %v1579
                %v1581 = vld [vmem:[%s1555 + $0x60] sm:$0xff]
                %1582 = vst [vmem:[%s1556 + $0xc0] sm:$0xff] %v1581
                %v1583 = vld [vmem:[%s1555 + $0x68] sm:$0xff]
                %1584 = vst [vmem:[%s1556 + $0xc8] sm:$0xff] %v1583
                %v1585 = vld [vmem:[%s1555 + $0x70] sm:$0xff]
                %1586 = vst [vmem:[%s1556 + $0xe0] sm:$0xff] %v1585
                %v1587 = vld [vmem:[%s1555 + $0x78] sm:$0xff]
                %1588 = vst [vmem:[%s1556 + $0xe8] sm:$0xff] %v1587
              $region114: #{tiny_rsnn_forward.1} parent=108 // loop_footer
                %s1554 = sadd.s32 1, %s1550
              $region115: #{tiny_rsnn_forward.1} parent=108 // loop_footer_branch
                %1549 = sbr.rel target = $region111
              $region116: #{tiny_rsnn_forward.1} parent=108 // loop_exit
                _
            $region109: #{tiny_rsnn_forward.1} parent=100 // pred_fallthru
              _
          $region101: #{tiny_rsnn_forward.1} parent=96 // pred_fallthru
            _
          %1633 = vnop
        $region97: #{tiny_rsnn_forward.1} parent=88 // pred_fallthru
          _
      $region89: #{tiny_rsnn_forward.1} parent=5 // pred_fallthru
        _
      %p1634 = scmp.le.s32.totalorder 2, %s14
      // Predicated region
      $region132: #{tiny_rsnn_forward.1} parent=5 // pred_check
        %p1635 = pneg %p1634
      $region133: #{tiny_rsnn_forward.1} parent=5 // pred_check_branch
        %1637 = sbr.rel (%p1635) target = $region135
      $region134: #{tiny_rsnn_forward.1} parent=5 // pred_region
        %s1638 = ssub.s32 %s14, 2
        // Predicated region
        $region136: #{tiny_rsnn_forward.1} parent=134 // pred_check
          %p1639 = pneg %p216
        $region137: #{tiny_rsnn_forward.1} parent=134 // pred_check_branch
          %1641 = sbr.rel (%p1639) target = $region139
        $region138: #{tiny_rsnn_forward.1} parent=134 // pred_region
          %s1642 = sand.u32 %s201, 1
          %s1643 = sand.u32 %s201, 1
          %s1644 = smul.addr %s1643, 128
          %s1645 = scalar_lea.vmem [#allocation3], %s1644
        $region139: #{tiny_rsnn_forward.1} parent=134 // pred_fallthru
          _
      $region135: #{tiny_rsnn_forward.1} parent=5 // pred_fallthru
        _
    $region6: #{tiny_rsnn_forward.1} parent=1 // loop_footer
      %s18 = sadd.s32 1, %s14
    $region7: #{tiny_rsnn_forward.1} parent=1 // loop_footer_branch
      %13 = sbr.rel target = $region3
    $region8: #{tiny_rsnn_forward.1} parent=1 // loop_exit
      _

</llo_original>
